<compile_context>
chip_gen: v5e
topology: v5e:2x2
jax: 0.10.0
libtpu: 0.0.40
codegen_flags: <defaults>
</compile_context>

<pallas_src>
import functools
import math

import numpy as np

import jax
import jax.numpy as jnp
from jax import lax
from jax.experimental import pallas as pl
from jax.experimental.pallas import tpu as pltpu


# ----------------------------------------------------------------------------
# Pallas kernel: one (batch, head) pair per grid step.
# ----------------------------------------------------------------------------
def mha_kernel(xT_ref, c_ref, mask_ref, wqT_ref, bq_ref, wk_ref, bk_ref,
               wv_ref, bv_ref, woT_ref, bo_ref, ekT_ref, ev_ref,
               o_ref, o_acc_ref, *, n_heads, k_channels, window):
    f32 = jnp.float32
    bf16 = jnp.bfloat16
    h = pl.program_id(1)

    t_len = xT_ref.shape[0]
    scale = 1.0 / math.sqrt(k_channels)

    xT = xT_ref[...]            # [T, C]   bf16
    ctx = c_ref[...]            # [C, T]   bf16

    # --- per-head 1x1-conv projections (MXU, K=C, f32 accumulation) ---------
    q = lax.dot_general(xT, wqT_ref[...], (((1,), (0,)), ((), ())),
                        preferred_element_type=f32)            # [T, D]
    q = (q + bq_ref[...]) * scale                               # scaled query
    k = lax.dot_general(wk_ref[...], ctx, (((1,), (0,)), ((), ())),
                        preferred_element_type=f32)            # [D, T]
    k = k + bk_ref[...]
    v = lax.dot_general(wv_ref[...], ctx, (((1,), (0,)), ((), ())),
                        preferred_element_type=f32)            # [D, T]
    v = v + bv_ref[...]

    qb = q.astype(bf16)

    # --- content scores: [T, D] @ [D, T] -> [T, T] ---------------------------
    scores = lax.dot_general(qb, k.astype(bf16), (((1,), (0,)), ((), ())),
                             preferred_element_type=f32)

    # --- relative-key logits (banded): qE = q @ Ek^T -> [T, 2W+1] ------------
    qe = lax.dot_general(qb, ekT_ref[...], (((1,), (0,)), ((), ())),
                         preferred_element_type=f32)
    row = lax.broadcasted_iota(jnp.int32, (t_len, t_len), 0)
    col = lax.broadcasted_iota(jnp.int32, (t_len, t_len), 1)
    rel = col - row                                             # s - t
    for m in range(2 * window + 1):
        scores = scores + jnp.where(rel == (m - window), qe[:, m:m + 1], 0.0)

    # --- mask + softmax (f32 elementwise; reciprocal on the EUP) -------------
    scores = jnp.where(mask_ref[...] == 0.0, -1e4, scores)
    smax = jnp.max(scores, axis=-1, keepdims=True)
    e = jnp.exp(scores - smax)
    p = e * pl.reciprocal(jnp.sum(e, axis=-1, keepdims=True), approx=True)
    # NOTE: dropout has p_dropout=0.0 -> identity.

    # --- value aggregation: out[t, d] = sum_s p[t, s] * v[d, s] --------------
    out = lax.dot_general(p.astype(bf16), v.astype(bf16),
                          (((1,), (1,)), ((), ())),
                          preferred_element_type=f32)          # [T, D]

    # --- relative-value contribution (banded diag extraction of p) ----------
    ev = ev_ref[...]                                            # [2W+1, D]
    for m in range(2 * window + 1):
        w_m = jnp.sum(jnp.where(rel == (m - window), p, 0.0),
                      axis=-1, keepdims=True)                   # [T, 1]
        out = out + w_m * ev[m:m + 1, :]                        # [T, D]

    # --- per-head slice of the output projection: [T, D] @ [D, C_out] --------
    contrib = lax.dot_general(out.astype(bf16), woT_ref[...],
                              (((1,), (0,)), ((), ())),
                              preferred_element_type=f32)       # [T, C_out]

    @pl.when(h == 0)
    def _():
        o_acc_ref[...] = jnp.zeros_like(o_acc_ref)

    o_acc_ref[...] += contrib

    @pl.when(h == n_heads - 1)
    def _():
        o_ref[...] = (o_acc_ref[...] + bo_ref[...]).astype(o_ref.dtype)


# ----------------------------------------------------------------------------
# Wrapper: layout glue + pallas_call.
# ----------------------------------------------------------------------------
def mha_forward(x, c, attn_mask, params, *, n_heads, window_size):
    B, C, T = x.shape
    D = C // n_heads
    C_out = params["wo"].shape[0]
    W = window_size
    n_rel = 2 * W + 1
    bf16 = jnp.bfloat16
    f32 = jnp.float32

    # Activations: x transposed once on the host so every in-kernel matmul is
    # canonical; both activations shipped as bf16 (half the HBM traffic).
    xT = jnp.transpose(x, (0, 2, 1)).astype(bf16)               # [B, T, C]
    c_b = c.astype(bf16)                                        # [B, C, T]
    mask = attn_mask.reshape(B, T, T).astype(f32)               # [B, T, T]

    # Per-head weight layouts (bf16 MXU operands).
    wqT_h = params["wq"].reshape(n_heads, D, C).transpose(0, 2, 1).astype(bf16)
    wk_h = params["wk"].reshape(n_heads, D, C).astype(bf16)
    wv_h = params["wv"].reshape(n_heads, D, C).astype(bf16)
    woT_h = params["wo"].reshape(C_out, n_heads, D).transpose(1, 2, 0).astype(bf16)
    bq_h = params["bq"].reshape(n_heads, 1, D).astype(f32)
    bk_h = params["bk"].reshape(n_heads, D, 1).astype(f32)
    bv_h = params["bv"].reshape(n_heads, D, 1).astype(f32)
    bo2 = params["bo"].reshape(1, C_out).astype(f32)

    # Compact relative embeddings (heads_share=True -> a single table).
    ekT = jnp.transpose(params["emb_rel_k"][0], (1, 0)).astype(bf16)  # [D, 2W+1]
    ev = params["emb_rel_v"][0].astype(f32)                           # [2W+1, D]

    kernel = functools.partial(mha_kernel, n_heads=n_heads,
                               k_channels=D, window=W)

    flops = int(B * (6 * T * C * C          # q/k/v projections
                     + 4 * T * T * C        # score + value matmuls (all heads)
                     + 2 * T * C * C_out    # output projection
                     + 2 * T * C * n_rel))  # relative-key matmuls
    transcendentals = int(B * n_heads * T * T)
    bytes_accessed = int(B * (2 * 2 * T * C + 4 * T * T + 4 * T * C_out)
                         + B * n_heads * 2 * (2 * C * D + D * C_out)
                         + 4 * (3 * C + C_out) + 3 * 2 * n_rel * D)

    out_tc = pl.pallas_call(
        kernel,
        out_shape=jax.ShapeDtypeStruct((B, T, C_out), f32),
        grid_spec=pltpu.PrefetchScalarGridSpec(
            num_scalar_prefetch=0,
            grid=(B, n_heads),
            in_specs=[
                pl.BlockSpec((None, T, C), lambda b, h: (b, 0, 0)),       # xT
                pl.BlockSpec((None, C, T), lambda b, h: (b, 0, 0)),       # c
                pl.BlockSpec((None, T, T), lambda b, h: (b, 0, 0)),       # mask
                pl.BlockSpec((None, C, D), lambda b, h: (h, 0, 0)),       # Wq^T_h
                pl.BlockSpec((None, 1, D), lambda b, h: (h, 0, 0)),       # bq_h
                pl.BlockSpec((None, D, C), lambda b, h: (h, 0, 0)),       # Wk_h
                pl.BlockSpec((None, D, 1), lambda b, h: (h, 0, 0)),       # bk_h
                pl.BlockSpec((None, D, C), lambda b, h: (h, 0, 0)),       # Wv_h
                pl.BlockSpec((None, D, 1), lambda b, h: (h, 0, 0)),       # bv_h
                pl.BlockSpec((None, D, C_out), lambda b, h: (h, 0, 0)),   # Wo^T_h
                pl.BlockSpec((1, C_out), lambda b, h: (0, 0)),            # bo
                pl.BlockSpec((D, n_rel), lambda b, h: (0, 0)),            # Ek^T
                pl.BlockSpec((n_rel, D), lambda b, h: (0, 0)),            # Ev
            ],
            out_specs=pl.BlockSpec((None, T, C_out), lambda b, h: (b, 0, 0)),
            scratch_shapes=[pltpu.VMEM((T, C_out), f32)],
        ),
        compiler_params=pltpu.CompilerParams(
            dimension_semantics=("parallel", "arbitrary"),
            vmem_limit_bytes=48 * 1024 * 1024),
        cost_estimate=pl.CostEstimate(flops=flops,
                                      transcendentals=transcendentals,
                                      bytes_accessed=bytes_accessed),
    )(xT, c_b, mask, wqT_h, bq_h, wk_h, bk_h, wv_h, bv_h, woT_h, bo2, ekT, ev)

    return jnp.transpose(out_tc, (0, 2, 1))                     # [B, C_out, T]


# ----------------------------------------------------------------------------
# Deterministic parameter init (synthetic; mirrors the module's shapes).
# ----------------------------------------------------------------------------
def init_params(key, channels, out_channels, n_heads, window_size):
    D = channels // n_heads
    ks = jax.random.split(key, 10)

    def xavier(k, shape):
        a = math.sqrt(6.0 / (shape[0] + shape[1]))
        return jax.random.uniform(k, shape, jnp.float32, -a, a)

    def bias(k, n, fan_in):
        b = 1.0 / math.sqrt(fan_in)
        return jax.random.uniform(k, (n,), jnp.float32, -b, b)

    rel_std = D ** -0.5
    return dict(
        wq=xavier(ks[0], (channels, channels)),
        bq=bias(ks[1], channels, channels),
        wk=xavier(ks[2], (channels, channels)),
        bk=bias(ks[3], channels, channels),
        wv=xavier(ks[4], (channels, channels)),
        bv=bias(ks[5], channels, channels),
        wo=xavier(ks[6], (out_channels, channels)),
        bo=bias(ks[7], out_channels, channels),
        emb_rel_k=jax.random.normal(ks[8], (1, 2 * window_size + 1, D),
                                    jnp.float32) * rel_std,
        emb_rel_v=jax.random.normal(ks[9], (1, 2 * window_size + 1, D),
                                    jnp.float32) * rel_std,
    )


# ----------------------------------------------------------------------------
# NumPy reference following the PyTorch code path exactly (pad/reshape tricks).
# ----------------------------------------------------------------------------
def reference_forward(x, c, mask, p, n_heads, window_size):
    x = np.asarray(x, np.float32)
    c = np.asarray(c, np.float32)
    mask = np.asarray(mask, np.float32)
    B, C, T = x.shape
    D = C // n_heads

    def conv1x1(w, b, inp):
        return np.einsum("oc,bct->bot", np.asarray(w), inp) \
            + np.asarray(b)[None, :, None]

    q = conv1x1(p["wq"], p["bq"], x)
    k = conv1x1(p["wk"], p["bk"], c)
    v = conv1x1(p["wv"], p["bv"], c)
    q4 = q.reshape(B, n_heads, D, T)
    k4 = k.reshape(B, n_heads, D, T)
    v4 = v.reshape(B, n_heads, D, T)
    qs = q4 / math.sqrt(D)
    scores = np.einsum("bhdt,bhds->bhts", qs, k4)

    def get_rel(emb, length):
        emb = np.asarray(emb, np.float32)
        pad_len = max(length - (window_size + 1), 0)
        start = max(window_size + 1 - length, 0)
        pe = np.pad(emb, ((0, 0), (pad_len, pad_len), (0, 0)))
        return pe[:, start:start + 2 * length - 1]

    def rel_to_abs(xx):
        b, h, l, _ = xx.shape
        xx = np.pad(xx, ((0, 0), (0, 0), (0, 0), (0, 1)))
        xf = xx.reshape(b, h, l * 2 * l)
        xf = np.pad(xf, ((0, 0), (0, 0), (0, l - 1)))
        return xf.reshape(b, h, l + 1, 2 * l - 1)[:, :, :l, l - 1:]

    def abs_to_rel(xx):
        b, h, l, _ = xx.shape
        xx = np.pad(xx, ((0, 0), (0, 0), (0, 0), (0, l - 1)))
        xf = xx.reshape(b, h, l * l + l * (l - 1))
        xf = np.pad(xf, ((0, 0), (0, 0), (l, 0)))
        return xf.reshape(b, h, l, 2 * l)[:, :, :, 1:]

    kre = get_rel(p["emb_rel_k"], T)
    rel_logits = np.einsum("bhdt,hed->bhte", qs, kre)
    scores = scores + rel_to_abs(rel_logits)
    scores = np.where(mask == 0, -1e4, scores)
    m = scores.max(-1, keepdims=True)
    e = np.exp(scores - m)
    p_attn = e / e.sum(-1, keepdims=True)
    out = np.einsum("bhcs,bhts->bhct", v4, p_attn)
    rw = abs_to_rel(p_attn)
    vre = get_rel(p["emb_rel_v"], T)
    out = out + np.einsum("bhte,hec->bhct", rw, vre)
    out = out.reshape(B, C, T)
    return conv1x1(p["wo"], p["bo"], out)


if __name__ == "__main__":
    B, C, C_OUT, H, T, W = 2, 32, 32, 4, 16, 4

    key = jax.random.PRNGKey(0)
    kx, kc, kp = jax.random.split(key, 3)
    x = jax.random.normal(kx, (B, C, T), jnp.float32)
    c = jax.random.normal(kc, (B, C, T), jnp.float32)

    # attn_mask [B, 1, T, T]: batch 0 fully valid, batch 1 valid length 12.
    lens = jnp.array([T, 12])
    valid = (jnp.arange(T)[None, :] < lens[:, None]).astype(jnp.float32)  # [B,T]
    mask = valid[:, None, :, None] * valid[:, None, None, :]              # [B,1,T,T]

    params = init_params(kp, C, C_OUT, H, W)

    # Round activations/params through bf16 once so both the (bf16-MXU) kernel
    # and the f32 reference see identical parameter values.
    def _bf16_round(a):
        return a.astype(jnp.bfloat16).astype(jnp.float32)

    x = _bf16_round(x)
    c = _bf16_round(c)
    params = jax.tree_util.tree_map(_bf16_round, params)

    y = mha_forward(x, c, mask, params, n_heads=H, window_size=W)
    y = jax.block_until_ready(y)

    y_ref = reference_forward(x, c, mask, params, H, W)
    assert y.shape == (B, C_OUT, T)
    np.testing.assert_allclose(np.asarray(y), y_ref, rtol=3e-2, atol=3e-2)
    print("KERNEL_OK")
</pallas_src>

<mosaic_0001>
module attributes {stable_mosaic.version = 11 : i64} {
  func.func @mha_kernel(%arg0: i32, %arg1: i32, %arg2: memref<1x16x32xbf16, #tpu.memory_space<vmem>>, %arg3: memref<1x32x16xbf16, #tpu.memory_space<vmem>>, %arg4: memref<1x16x16xf32, #tpu.memory_space<vmem>>, %arg5: memref<1x32x8xbf16, #tpu.memory_space<vmem>>, %arg6: memref<1x1x8xf32, #tpu.memory_space<vmem>>, %arg7: memref<1x8x32xbf16, #tpu.memory_space<vmem>>, %arg8: memref<1x8x1xf32, #tpu.memory_space<vmem>>, %arg9: memref<1x8x32xbf16, #tpu.memory_space<vmem>>, %arg10: memref<1x8x1xf32, #tpu.memory_space<vmem>>, %arg11: memref<1x8x32xbf16, #tpu.memory_space<vmem>>, %arg12: memref<1x32xf32, #tpu.memory_space<vmem>>, %arg13: memref<8x9xbf16, #tpu.memory_space<vmem>>, %arg14: memref<9x8xf32, #tpu.memory_space<vmem>>, %arg15: memref<1x16x32xf32, #tpu.memory_space<vmem>>, %arg16: memref<16x32xf32, #tpu.memory_space<vmem>>) attributes {dimension_semantics = [#tpu.dimension_semantics<parallel>, #tpu.dimension_semantics<arbitrary>], iteration_bounds = array<i64: 2, 4>, scalar_prefetch = 0 : i64, scratch_operands = 1 : i64, tpu.core_type = #tpu.core_type<tc>, window_params = [{transform_indices = @transform_0, window_bounds = array<i64: 1, 16, 32>}, {transform_indices = @transform_1, window_bounds = array<i64: 1, 32, 16>}, {transform_indices = @transform_2, window_bounds = array<i64: 1, 16, 16>}, {transform_indices = @transform_3, window_bounds = array<i64: 1, 32, 8>}, {transform_indices = @transform_4, window_bounds = array<i64: 1, 1, 8>}, {transform_indices = @transform_5, window_bounds = array<i64: 1, 8, 32>}, {transform_indices = @transform_6, window_bounds = array<i64: 1, 8, 1>}, {transform_indices = @transform_7, window_bounds = array<i64: 1, 8, 32>}, {transform_indices = @transform_8, window_bounds = array<i64: 1, 8, 1>}, {transform_indices = @transform_9, window_bounds = array<i64: 1, 8, 32>}, {pipeline_mode = #tpu.pipeline_mode<synchronous>, transform_indices = @transform_10, window_bounds = array<i64: 1, 32>}, {pipeline_mode = #tpu.pipeline_mode<synchronous>, transform_indices = @transform_11, window_bounds = array<i64: 8, 9>}, {pipeline_mode = #tpu.pipeline_mode<synchronous>, transform_indices = @transform_12, window_bounds = array<i64: 9, 8>}, {transform_indices = @transform_13, window_bounds = array<i64: 1, 16, 32>}]} {
    %c0 = arith.constant 0 : index
    %c0_0 = arith.constant 0 : index
    %c0_1 = arith.constant 0 : index
    %0 = vector.load %arg2[%c0, %c0_0, %c0_1] : memref<1x16x32xbf16, #tpu.memory_space<vmem>>, vector<1x16x32xbf16>
    %1 = vector.shape_cast %0 : vector<1x16x32xbf16> to vector<16x32xbf16>
    %c0_2 = arith.constant 0 : index
    %c0_3 = arith.constant 0 : index
    %c0_4 = arith.constant 0 : index
    %2 = vector.load %arg3[%c0_2, %c0_3, %c0_4] : memref<1x32x16xbf16, #tpu.memory_space<vmem>>, vector<1x32x16xbf16>
    %3 = vector.shape_cast %2 : vector<1x32x16xbf16> to vector<32x16xbf16>
    %c0_5 = arith.constant 0 : index
    %c0_6 = arith.constant 0 : index
    %c0_7 = arith.constant 0 : index
    %4 = vector.load %arg5[%c0_5, %c0_6, %c0_7] : memref<1x32x8xbf16, #tpu.memory_space<vmem>>, vector<1x32x8xbf16>
    %5 = vector.shape_cast %4 : vector<1x32x8xbf16> to vector<32x8xbf16>
    %cst = arith.constant dense<0.000000e+00> : vector<16x8xf32>
    %6 = tpu.matmul %1, %5, %cst {dimension_numbers = #tpu.dot_dimension_numbers<[1], [0], [0], [1], [0, 0, 1, 1], [], []>} : vector<16x32xbf16>, vector<32x8xbf16>, vector<16x8xf32> -> vector<16x8xf32>
    %c0_8 = arith.constant 0 : index
    %c0_9 = arith.constant 0 : index
    %c0_10 = arith.constant 0 : index
    %7 = vector.load %arg6[%c0_8, %c0_9, %c0_10] : memref<1x1x8xf32, #tpu.memory_space<vmem>>, vector<1x1x8xf32>
    %8 = vector.shape_cast %7 : vector<1x1x8xf32> to vector<1x8xf32>
    %9 = vector.broadcast %8 : vector<1x8xf32> to vector<16x8xf32>
    %10 = arith.addf %6, %9 : vector<16x8xf32>
    %cst_11 = arith.constant 0.353553385 : f32
    %11 = vector.broadcast %cst_11 : f32 to vector<16x8xf32>
    %12 = arith.mulf %10, %11 : vector<16x8xf32>
    %c0_12 = arith.constant 0 : index
    %c0_13 = arith.constant 0 : index
    %c0_14 = arith.constant 0 : index
    %13 = vector.load %arg7[%c0_12, %c0_13, %c0_14] : memref<1x8x32xbf16, #tpu.memory_space<vmem>>, vector<1x8x32xbf16>
    %14 = vector.shape_cast %13 : vector<1x8x32xbf16> to vector<8x32xbf16>
    %cst_15 = arith.constant dense<0.000000e+00> : vector<8x16xf32>
    %15 = tpu.matmul %14, %3, %cst_15 {dimension_numbers = #tpu.dot_dimension_numbers<[1], [0], [0], [1], [0, 0, 1, 1], [], []>} : vector<8x32xbf16>, vector<32x16xbf16>, vector<8x16xf32> -> vector<8x16xf32>
    %c0_16 = arith.constant 0 : index
    %c0_17 = arith.constant 0 : index
    %c0_18 = arith.constant 0 : index
    %16 = vector.load %arg8[%c0_16, %c0_17, %c0_18] : memref<1x8x1xf32, #tpu.memory_space<vmem>>, vector<1x8x1xf32>
    %17 = vector.shape_cast %16 : vector<1x8x1xf32> to vector<8x1xf32>
    %18 = vector.broadcast %17 : vector<8x1xf32> to vector<8x16xf32>
    %19 = arith.addf %15, %18 : vector<8x16xf32>
    %c0_19 = arith.constant 0 : index
    %c0_20 = arith.constant 0 : index
    %c0_21 = arith.constant 0 : index
    %20 = vector.load %arg9[%c0_19, %c0_20, %c0_21] : memref<1x8x32xbf16, #tpu.memory_space<vmem>>, vector<1x8x32xbf16>
    %21 = vector.shape_cast %20 : vector<1x8x32xbf16> to vector<8x32xbf16>
    %cst_22 = arith.constant dense<0.000000e+00> : vector<8x16xf32>
    %22 = tpu.matmul %21, %3, %cst_22 {dimension_numbers = #tpu.dot_dimension_numbers<[1], [0], [0], [1], [0, 0, 1, 1], [], []>} : vector<8x32xbf16>, vector<32x16xbf16>, vector<8x16xf32> -> vector<8x16xf32>
    %c0_23 = arith.constant 0 : index
    %c0_24 = arith.constant 0 : index
    %c0_25 = arith.constant 0 : index
    %23 = vector.load %arg10[%c0_23, %c0_24, %c0_25] : memref<1x8x1xf32, #tpu.memory_space<vmem>>, vector<1x8x1xf32>
    %24 = vector.shape_cast %23 : vector<1x8x1xf32> to vector<8x1xf32>
    %25 = vector.broadcast %24 : vector<8x1xf32> to vector<8x16xf32>
    %26 = arith.addf %22, %25 : vector<8x16xf32>
    %27 = arith.truncf %12 : vector<16x8xf32> to vector<16x8xbf16>
    %28 = arith.truncf %19 : vector<8x16xf32> to vector<8x16xbf16>
    %cst_26 = arith.constant dense<0.000000e+00> : vector<16x16xf32>
    %29 = tpu.matmul %27, %28, %cst_26 {dimension_numbers = #tpu.dot_dimension_numbers<[1], [0], [0], [1], [0, 0, 1, 1], [], []>} : vector<16x8xbf16>, vector<8x16xbf16>, vector<16x16xf32> -> vector<16x16xf32>
    %c0_27 = arith.constant 0 : index
    %c0_28 = arith.constant 0 : index
    %30 = vector.load %arg13[%c0_27, %c0_28] : memref<8x9xbf16, #tpu.memory_space<vmem>>, vector<8x9xbf16>
    %cst_29 = arith.constant dense<0.000000e+00> : vector<16x9xf32>
    %31 = tpu.matmul %27, %30, %cst_29 {dimension_numbers = #tpu.dot_dimension_numbers<[1], [0], [0], [1], [0, 0, 1, 1], [], []>} : vector<16x8xbf16>, vector<8x9xbf16>, vector<16x9xf32> -> vector<16x9xf32>
    %32 = tpu.iota {dimensions = array<i32: 0>} : vector<16x16xi32>
    %33 = tpu.iota {dimensions = array<i32: 1>} : vector<16x16xi32>
    %34 = arith.subi %33, %32 : vector<16x16xi32>
    %c-4_i32 = arith.constant -4 : i32
    %35 = vector.broadcast %c-4_i32 : i32 to vector<16x16xi32>
    %36 = arith.cmpi eq, %34, %35 : vector<16x16xi32>
    %37 = vector.extract_strided_slice %31 {offsets = [0, 0], sizes = [16, 1], strides = [1, 1]} : vector<16x9xf32> to vector<16x1xf32>
    %cst_30 = arith.constant 0.000000e+00 : f32
    %38 = vector.shape_cast %37 : vector<16x1xf32> to vector<16x1xf32>
    %39 = vector.broadcast %38 : vector<16x1xf32> to vector<16x16xf32>
    %40 = vector.broadcast %cst_30 : f32 to vector<16x16xf32>
    %41 = arith.select %36, %39, %40 : vector<16x16xi1>, vector<16x16xf32>
    %42 = arith.addf %29, %41 : vector<16x16xf32>
    %c-3_i32 = arith.constant -3 : i32
    %43 = vector.broadcast %c-3_i32 : i32 to vector<16x16xi32>
    %44 = arith.cmpi eq, %34, %43 : vector<16x16xi32>
    %45 = vector.extract_strided_slice %31 {offsets = [0, 1], sizes = [16, 1], strides = [1, 1]} : vector<16x9xf32> to vector<16x1xf32>
    %cst_31 = arith.constant 0.000000e+00 : f32
    %46 = vector.shape_cast %45 : vector<16x1xf32> to vector<16x1xf32>
    %47 = vector.broadcast %46 : vector<16x1xf32> to vector<16x16xf32>
    %48 = vector.broadcast %cst_31 : f32 to vector<16x16xf32>
    %49 = arith.select %44, %47, %48 : vector<16x16xi1>, vector<16x16xf32>
    %50 = arith.addf %42, %49 : vector<16x16xf32>
    %c-2_i32 = arith.constant -2 : i32
    %51 = vector.broadcast %c-2_i32 : i32 to vector<16x16xi32>
    %52 = arith.cmpi eq, %34, %51 : vector<16x16xi32>
    %53 = vector.extract_strided_slice %31 {offsets = [0, 2], sizes = [16, 1], strides = [1, 1]} : vector<16x9xf32> to vector<16x1xf32>
    %cst_32 = arith.constant 0.000000e+00 : f32
    %54 = vector.shape_cast %53 : vector<16x1xf32> to vector<16x1xf32>
    %55 = vector.broadcast %54 : vector<16x1xf32> to vector<16x16xf32>
    %56 = vector.broadcast %cst_32 : f32 to vector<16x16xf32>
    %57 = arith.select %52, %55, %56 : vector<16x16xi1>, vector<16x16xf32>
    %58 = arith.addf %50, %57 : vector<16x16xf32>
    %c-1_i32 = arith.constant -1 : i32
    %59 = vector.broadcast %c-1_i32 : i32 to vector<16x16xi32>
    %60 = arith.cmpi eq, %34, %59 : vector<16x16xi32>
    %61 = vector.extract_strided_slice %31 {offsets = [0, 3], sizes = [16, 1], strides = [1, 1]} : vector<16x9xf32> to vector<16x1xf32>
    %cst_33 = arith.constant 0.000000e+00 : f32
    %62 = vector.shape_cast %61 : vector<16x1xf32> to vector<16x1xf32>
    %63 = vector.broadcast %62 : vector<16x1xf32> to vector<16x16xf32>
    %64 = vector.broadcast %cst_33 : f32 to vector<16x16xf32>
    %65 = arith.select %60, %63, %64 : vector<16x16xi1>, vector<16x16xf32>
    %66 = arith.addf %58, %65 : vector<16x16xf32>
    %c0_i32 = arith.constant 0 : i32
    %67 = vector.broadcast %c0_i32 : i32 to vector<16x16xi32>
    %68 = arith.cmpi eq, %34, %67 : vector<16x16xi32>
    %69 = vector.extract_strided_slice %31 {offsets = [0, 4], sizes = [16, 1], strides = [1, 1]} : vector<16x9xf32> to vector<16x1xf32>
    %cst_34 = arith.constant 0.000000e+00 : f32
    %70 = vector.shape_cast %69 : vector<16x1xf32> to vector<16x1xf32>
    %71 = vector.broadcast %70 : vector<16x1xf32> to vector<16x16xf32>
    %72 = vector.broadcast %cst_34 : f32 to vector<16x16xf32>
    %73 = arith.select %68, %71, %72 : vector<16x16xi1>, vector<16x16xf32>
    %74 = arith.addf %66, %73 : vector<16x16xf32>
    %c1_i32 = arith.constant 1 : i32
    %75 = vector.broadcast %c1_i32 : i32 to vector<16x16xi32>
    %76 = arith.cmpi eq, %34, %75 : vector<16x16xi32>
    %77 = vector.extract_strided_slice %31 {offsets = [0, 5], sizes = [16, 1], strides = [1, 1]} : vector<16x9xf32> to vector<16x1xf32>
    %cst_35 = arith.constant 0.000000e+00 : f32
    %78 = vector.shape_cast %77 : vector<16x1xf32> to vector<16x1xf32>
    %79 = vector.broadcast %78 : vector<16x1xf32> to vector<16x16xf32>
    %80 = vector.broadcast %cst_35 : f32 to vector<16x16xf32>
    %81 = arith.select %76, %79, %80 : vector<16x16xi1>, vector<16x16xf32>
    %82 = arith.addf %74, %81 : vector<16x16xf32>
    %c2_i32 = arith.constant 2 : i32
    %83 = vector.broadcast %c2_i32 : i32 to vector<16x16xi32>
    %84 = arith.cmpi eq, %34, %83 : vector<16x16xi32>
    %85 = vector.extract_strided_slice %31 {offsets = [0, 6], sizes = [16, 1], strides = [1, 1]} : vector<16x9xf32> to vector<16x1xf32>
    %cst_36 = arith.constant 0.000000e+00 : f32
    %86 = vector.shape_cast %85 : vector<16x1xf32> to vector<16x1xf32>
    %87 = vector.broadcast %86 : vector<16x1xf32> to vector<16x16xf32>
    %88 = vector.broadcast %cst_36 : f32 to vector<16x16xf32>
    %89 = arith.select %84, %87, %88 : vector<16x16xi1>, vector<16x16xf32>
    %90 = arith.addf %82, %89 : vector<16x16xf32>
    %c3_i32 = arith.constant 3 : i32
    %91 = vector.broadcast %c3_i32 : i32 to vector<16x16xi32>
    %92 = arith.cmpi eq, %34, %91 : vector<16x16xi32>
    %93 = vector.extract_strided_slice %31 {offsets = [0, 7], sizes = [16, 1], strides = [1, 1]} : vector<16x9xf32> to vector<16x1xf32>
    %cst_37 = arith.constant 0.000000e+00 : f32
    %94 = vector.shape_cast %93 : vector<16x1xf32> to vector<16x1xf32>
    %95 = vector.broadcast %94 : vector<16x1xf32> to vector<16x16xf32>
    %96 = vector.broadcast %cst_37 : f32 to vector<16x16xf32>
    %97 = arith.select %92, %95, %96 : vector<16x16xi1>, vector<16x16xf32>
    %98 = arith.addf %90, %97 : vector<16x16xf32>
    %c4_i32 = arith.constant 4 : i32
    %99 = vector.broadcast %c4_i32 : i32 to vector<16x16xi32>
    %100 = arith.cmpi eq, %34, %99 : vector<16x16xi32>
    %101 = vector.extract_strided_slice %31 {offsets = [0, 8], sizes = [16, 1], strides = [1, 1]} : vector<16x9xf32> to vector<16x1xf32>
    %cst_38 = arith.constant 0.000000e+00 : f32
    %102 = vector.shape_cast %101 : vector<16x1xf32> to vector<16x1xf32>
    %103 = vector.broadcast %102 : vector<16x1xf32> to vector<16x16xf32>
    %104 = vector.broadcast %cst_38 : f32 to vector<16x16xf32>
    %105 = arith.select %100, %103, %104 : vector<16x16xi1>, vector<16x16xf32>
    %106 = arith.addf %98, %105 : vector<16x16xf32>
    %c0_39 = arith.constant 0 : index
    %c0_40 = arith.constant 0 : index
    %c0_41 = arith.constant 0 : index
    %107 = vector.load %arg4[%c0_39, %c0_40, %c0_41] : memref<1x16x16xf32, #tpu.memory_space<vmem>>, vector<1x16x16xf32>
    %108 = vector.shape_cast %107 : vector<1x16x16xf32> to vector<16x16xf32>
    %cst_42 = arith.constant 0.000000e+00 : f32
    %109 = vector.broadcast %cst_42 : f32 to vector<16x16xf32>
    %110 = arith.cmpf oeq, %108, %109 : vector<16x16xf32>
    %cst_43 = arith.constant -1.000000e+04 : f32
    %111 = vector.broadcast %cst_43 : f32 to vector<16x16xf32>
    %112 = arith.select %110, %111, %106 : vector<16x16xi1>, vector<16x16xf32>
    %cst_44 = arith.constant dense<0xFF800000> : vector<16xf32>
    %113 = vector.multi_reduction <maximumf>, %112, %cst_44 [1] : vector<16x16xf32> to vector<16xf32>
    %114 = vector.shape_cast %113 : vector<16xf32> to vector<16x1xf32>
    %115 = vector.broadcast %114 : vector<16x1xf32> to vector<16x16xf32>
    %116 = arith.subf %112, %115 : vector<16x16xf32>
    %117 = math.exp %116 : vector<16x16xf32>
    %cst_45 = arith.constant dense<0.000000e+00> : vector<16xf32>
    %118 = vector.multi_reduction <add>, %117, %cst_45 [1] : vector<16x16xf32> to vector<16xf32>
    %119 = vector.shape_cast %118 : vector<16xf32> to vector<16x1xf32>
    %120 = tpu.reciprocal %119 {approx = true} : vector<16x1xf32> -> vector<16x1xf32>
    %121 = vector.broadcast %120 : vector<16x1xf32> to vector<16x16xf32>
    %122 = arith.mulf %117, %121 : vector<16x16xf32>
    %123 = arith.truncf %122 : vector<16x16xf32> to vector<16x16xbf16>
    %124 = arith.truncf %26 : vector<8x16xf32> to vector<8x16xbf16>
    %cst_46 = arith.constant dense<0.000000e+00> : vector<16x8xf32>
    %125 = tpu.matmul %123, %124, %cst_46 {dimension_numbers = #tpu.dot_dimension_numbers<[1], [1], [0], [0], [0, 0, 1, 0], [], []>} : vector<16x16xbf16>, vector<8x16xbf16>, vector<16x8xf32> -> vector<16x8xf32>
    %c0_47 = arith.constant 0 : index
    %c0_48 = arith.constant 0 : index
    %126 = vector.load %arg14[%c0_47, %c0_48] : memref<9x8xf32, #tpu.memory_space<vmem>>, vector<9x8xf32>
    %c-4_i32_49 = arith.constant -4 : i32
    %127 = vector.broadcast %c-4_i32_49 : i32 to vector<16x16xi32>
    %128 = arith.cmpi eq, %34, %127 : vector<16x16xi32>
    %cst_50 = arith.constant 0.000000e+00 : f32
    %129 = vector.broadcast %cst_50 : f32 to vector<16x16xf32>
    %130 = arith.select %128, %122, %129 : vector<16x16xi1>, vector<16x16xf32>
    %cst_51 = arith.constant dense<0.000000e+00> : vector<16xf32>
    %131 = vector.multi_reduction <add>, %130, %cst_51 [1] : vector<16x16xf32> to vector<16xf32>
    %132 = vector.shape_cast %131 : vector<16xf32> to vector<16x1xf32>
    %133 = vector.extract_strided_slice %126 {offsets = [0, 0], sizes = [1, 8], strides = [1, 1]} : vector<9x8xf32> to vector<1x8xf32>
    %134 = vector.broadcast %132 : vector<16x1xf32> to vector<16x8xf32>
    %135 = vector.broadcast %133 : vector<1x8xf32> to vector<16x8xf32>
    %136 = arith.mulf %134, %135 : vector<16x8xf32>
    %137 = arith.addf %125, %136 : vector<16x8xf32>
    %c-3_i32_52 = arith.constant -3 : i32
    %138 = vector.broadcast %c-3_i32_52 : i32 to vector<16x16xi32>
    %139 = arith.cmpi eq, %34, %138 : vector<16x16xi32>
    %cst_53 = arith.constant 0.000000e+00 : f32
    %140 = vector.broadcast %cst_53 : f32 to vector<16x16xf32>
    %141 = arith.select %139, %122, %140 : vector<16x16xi1>, vector<16x16xf32>
    %cst_54 = arith.constant dense<0.000000e+00> : vector<16xf32>
    %142 = vector.multi_reduction <add>, %141, %cst_54 [1] : vector<16x16xf32> to vector<16xf32>
    %143 = vector.shape_cast %142 : vector<16xf32> to vector<16x1xf32>
    %144 = vector.extract_strided_slice %126 {offsets = [1, 0], sizes = [1, 8], strides = [1, 1]} : vector<9x8xf32> to vector<1x8xf32>
    %145 = vector.broadcast %143 : vector<16x1xf32> to vector<16x8xf32>
    %146 = vector.broadcast %144 : vector<1x8xf32> to vector<16x8xf32>
    %147 = arith.mulf %145, %146 : vector<16x8xf32>
    %148 = arith.addf %137, %147 : vector<16x8xf32>
    %c-2_i32_55 = arith.constant -2 : i32
    %149 = vector.broadcast %c-2_i32_55 : i32 to vector<16x16xi32>
    %150 = arith.cmpi eq, %34, %149 : vector<16x16xi32>
    %cst_56 = arith.constant 0.000000e+00 : f32
    %151 = vector.broadcast %cst_56 : f32 to vector<16x16xf32>
    %152 = arith.select %150, %122, %151 : vector<16x16xi1>, vector<16x16xf32>
    %cst_57 = arith.constant dense<0.000000e+00> : vector<16xf32>
    %153 = vector.multi_reduction <add>, %152, %cst_57 [1] : vector<16x16xf32> to vector<16xf32>
    %154 = vector.shape_cast %153 : vector<16xf32> to vector<16x1xf32>
    %155 = vector.extract_strided_slice %126 {offsets = [2, 0], sizes = [1, 8], strides = [1, 1]} : vector<9x8xf32> to vector<1x8xf32>
    %156 = vector.broadcast %154 : vector<16x1xf32> to vector<16x8xf32>
    %157 = vector.broadcast %155 : vector<1x8xf32> to vector<16x8xf32>
    %158 = arith.mulf %156, %157 : vector<16x8xf32>
    %159 = arith.addf %148, %158 : vector<16x8xf32>
    %c-1_i32_58 = arith.constant -1 : i32
    %160 = vector.broadcast %c-1_i32_58 : i32 to vector<16x16xi32>
    %161 = arith.cmpi eq, %34, %160 : vector<16x16xi32>
    %cst_59 = arith.constant 0.000000e+00 : f32
    %162 = vector.broadcast %cst_59 : f32 to vector<16x16xf32>
    %163 = arith.select %161, %122, %162 : vector<16x16xi1>, vector<16x16xf32>
    %cst_60 = arith.constant dense<0.000000e+00> : vector<16xf32>
    %164 = vector.multi_reduction <add>, %163, %cst_60 [1] : vector<16x16xf32> to vector<16xf32>
    %165 = vector.shape_cast %164 : vector<16xf32> to vector<16x1xf32>
    %166 = vector.extract_strided_slice %126 {offsets = [3, 0], sizes = [1, 8], strides = [1, 1]} : vector<9x8xf32> to vector<1x8xf32>
    %167 = vector.broadcast %165 : vector<16x1xf32> to vector<16x8xf32>
    %168 = vector.broadcast %166 : vector<1x8xf32> to vector<16x8xf32>
    %169 = arith.mulf %167, %168 : vector<16x8xf32>
    %170 = arith.addf %159, %169 : vector<16x8xf32>
    %c0_i32_61 = arith.constant 0 : i32
    %171 = vector.broadcast %c0_i32_61 : i32 to vector<16x16xi32>
    %172 = arith.cmpi eq, %34, %171 : vector<16x16xi32>
    %cst_62 = arith.constant 0.000000e+00 : f32
    %173 = vector.broadcast %cst_62 : f32 to vector<16x16xf32>
    %174 = arith.select %172, %122, %173 : vector<16x16xi1>, vector<16x16xf32>
    %cst_63 = arith.constant dense<0.000000e+00> : vector<16xf32>
    %175 = vector.multi_reduction <add>, %174, %cst_63 [1] : vector<16x16xf32> to vector<16xf32>
    %176 = vector.shape_cast %175 : vector<16xf32> to vector<16x1xf32>
    %177 = vector.extract_strided_slice %126 {offsets = [4, 0], sizes = [1, 8], strides = [1, 1]} : vector<9x8xf32> to vector<1x8xf32>
    %178 = vector.broadcast %176 : vector<16x1xf32> to vector<16x8xf32>
    %179 = vector.broadcast %177 : vector<1x8xf32> to vector<16x8xf32>
    %180 = arith.mulf %178, %179 : vector<16x8xf32>
    %181 = arith.addf %170, %180 : vector<16x8xf32>
    %c1_i32_64 = arith.constant 1 : i32
    %182 = vector.broadcast %c1_i32_64 : i32 to vector<16x16xi32>
    %183 = arith.cmpi eq, %34, %182 : vector<16x16xi32>
    %cst_65 = arith.constant 0.000000e+00 : f32
    %184 = vector.broadcast %cst_65 : f32 to vector<16x16xf32>
    %185 = arith.select %183, %122, %184 : vector<16x16xi1>, vector<16x16xf32>
    %cst_66 = arith.constant dense<0.000000e+00> : vector<16xf32>
    %186 = vector.multi_reduction <add>, %185, %cst_66 [1] : vector<16x16xf32> to vector<16xf32>
    %187 = vector.shape_cast %186 : vector<16xf32> to vector<16x1xf32>
    %188 = vector.extract_strided_slice %126 {offsets = [5, 0], sizes = [1, 8], strides = [1, 1]} : vector<9x8xf32> to vector<1x8xf32>
    %189 = vector.broadcast %187 : vector<16x1xf32> to vector<16x8xf32>
    %190 = vector.broadcast %188 : vector<1x8xf32> to vector<16x8xf32>
    %191 = arith.mulf %189, %190 : vector<16x8xf32>
    %192 = arith.addf %181, %191 : vector<16x8xf32>
    %c2_i32_67 = arith.constant 2 : i32
    %193 = vector.broadcast %c2_i32_67 : i32 to vector<16x16xi32>
    %194 = arith.cmpi eq, %34, %193 : vector<16x16xi32>
    %cst_68 = arith.constant 0.000000e+00 : f32
    %195 = vector.broadcast %cst_68 : f32 to vector<16x16xf32>
    %196 = arith.select %194, %122, %195 : vector<16x16xi1>, vector<16x16xf32>
    %cst_69 = arith.constant dense<0.000000e+00> : vector<16xf32>
    %197 = vector.multi_reduction <add>, %196, %cst_69 [1] : vector<16x16xf32> to vector<16xf32>
    %198 = vector.shape_cast %197 : vector<16xf32> to vector<16x1xf32>
    %199 = vector.extract_strided_slice %126 {offsets = [6, 0], sizes = [1, 8], strides = [1, 1]} : vector<9x8xf32> to vector<1x8xf32>
    %200 = vector.broadcast %198 : vector<16x1xf32> to vector<16x8xf32>
    %201 = vector.broadcast %199 : vector<1x8xf32> to vector<16x8xf32>
    %202 = arith.mulf %200, %201 : vector<16x8xf32>
    %203 = arith.addf %192, %202 : vector<16x8xf32>
    %c3_i32_70 = arith.constant 3 : i32
    %204 = vector.broadcast %c3_i32_70 : i32 to vector<16x16xi32>
    %205 = arith.cmpi eq, %34, %204 : vector<16x16xi32>
    %cst_71 = arith.constant 0.000000e+00 : f32
    %206 = vector.broadcast %cst_71 : f32 to vector<16x16xf32>
    %207 = arith.select %205, %122, %206 : vector<16x16xi1>, vector<16x16xf32>
    %cst_72 = arith.constant dense<0.000000e+00> : vector<16xf32>
    %208 = vector.multi_reduction <add>, %207, %cst_72 [1] : vector<16x16xf32> to vector<16xf32>
    %209 = vector.shape_cast %208 : vector<16xf32> to vector<16x1xf32>
    %210 = vector.extract_strided_slice %126 {offsets = [7, 0], sizes = [1, 8], strides = [1, 1]} : vector<9x8xf32> to vector<1x8xf32>
    %211 = vector.broadcast %209 : vector<16x1xf32> to vector<16x8xf32>
    %212 = vector.broadcast %210 : vector<1x8xf32> to vector<16x8xf32>
    %213 = arith.mulf %211, %212 : vector<16x8xf32>
    %214 = arith.addf %203, %213 : vector<16x8xf32>
    %c4_i32_73 = arith.constant 4 : i32
    %215 = vector.broadcast %c4_i32_73 : i32 to vector<16x16xi32>
    %216 = arith.cmpi eq, %34, %215 : vector<16x16xi32>
    %cst_74 = arith.constant 0.000000e+00 : f32
    %217 = vector.broadcast %cst_74 : f32 to vector<16x16xf32>
    %218 = arith.select %216, %122, %217 : vector<16x16xi1>, vector<16x16xf32>
    %cst_75 = arith.constant dense<0.000000e+00> : vector<16xf32>
    %219 = vector.multi_reduction <add>, %218, %cst_75 [1] : vector<16x16xf32> to vector<16xf32>
    %220 = vector.shape_cast %219 : vector<16xf32> to vector<16x1xf32>
    %221 = vector.extract_strided_slice %126 {offsets = [8, 0], sizes = [1, 8], strides = [1, 1]} : vector<9x8xf32> to vector<1x8xf32>
    %222 = vector.broadcast %220 : vector<16x1xf32> to vector<16x8xf32>
    %223 = vector.broadcast %221 : vector<1x8xf32> to vector<16x8xf32>
    %224 = arith.mulf %222, %223 : vector<16x8xf32>
    %225 = arith.addf %214, %224 : vector<16x8xf32>
    %226 = arith.truncf %225 : vector<16x8xf32> to vector<16x8xbf16>
    %c0_76 = arith.constant 0 : index
    %c0_77 = arith.constant 0 : index
    %c0_78 = arith.constant 0 : index
    %227 = vector.load %arg11[%c0_76, %c0_77, %c0_78] : memref<1x8x32xbf16, #tpu.memory_space<vmem>>, vector<1x8x32xbf16>
    %228 = vector.shape_cast %227 : vector<1x8x32xbf16> to vector<8x32xbf16>
    %cst_79 = arith.constant dense<0.000000e+00> : vector<16x32xf32>
    %229 = tpu.matmul %226, %228, %cst_79 {dimension_numbers = #tpu.dot_dimension_numbers<[1], [0], [0], [1], [0, 0, 1, 1], [], []>} : vector<16x8xbf16>, vector<8x32xbf16>, vector<16x32xf32> -> vector<16x32xf32>
    %c0_i32_80 = arith.constant 0 : i32
    %230 = arith.cmpi eq, %arg1, %c0_i32_80 : i32
    %231 = arith.extui %230 : i1 to i32
    %c0_i32_81 = arith.constant 0 : i32
    %232 = arith.cmpi ne, %231, %c0_i32_81 : i32
    scf.if %232 {
      %cst_88 = arith.constant 0.000000e+00 : f32
      %239 = vector.broadcast %cst_88 : f32 to vector<16x32xf32>
      %c0_89 = arith.constant 0 : index
      %c0_90 = arith.constant 0 : index
      %240 = vector.load %arg16[%c0_89, %c0_90] : memref<16x32xf32, #tpu.memory_space<vmem>>, vector<16x32xf32>
      tpu.vector_store %arg16[%c0_89, %c0_90], %239 {strides = array<i32>} : memref<16x32xf32, #tpu.memory_space<vmem>>, vector<16x32xf32>,
    } else {
    }
    %c0_82 = arith.constant 0 : index
    %c0_83 = arith.constant 0 : index
    %233 = vector.load %arg16[%c0_82, %c0_83] : memref<16x32xf32, #tpu.memory_space<vmem>>, vector<16x32xf32>
    %234 = arith.addf %233, %229 : vector<16x32xf32>
    %c0_84 = arith.constant 0 : index
    %c0_85 = arith.constant 0 : index
    %235 = vector.load %arg16[%c0_84, %c0_85] : memref<16x32xf32, #tpu.memory_space<vmem>>, vector<16x32xf32>
    tpu.vector_store %arg16[%c0_84, %c0_85], %234 {strides = array<i32>} : memref<16x32xf32, #tpu.memory_space<vmem>>, vector<16x32xf32>,
    %c3_i32_86 = arith.constant 3 : i32
    %236 = arith.cmpi eq, %arg1, %c3_i32_86 : i32
    %237 = arith.extui %236 : i1 to i32
    %c0_i32_87 = arith.constant 0 : i32
    %238 = arith.cmpi ne, %237, %c0_i32_87 : i32
    scf.if %238 {
      %c0_88 = arith.constant 0 : index
      %c0_89 = arith.constant 0 : index
      %239 = vector.load %arg16[%c0_88, %c0_89] : memref<16x32xf32, #tpu.memory_space<vmem>>, vector<16x32xf32>
      %c0_90 = arith.constant 0 : index
      %c0_91 = arith.constant 0 : index
      %240 = vector.load %arg12[%c0_90, %c0_91] : memref<1x32xf32, #tpu.memory_space<vmem>>, vector<1x32xf32>
      %241 = vector.broadcast %240 : vector<1x32xf32> to vector<16x32xf32>
      %242 = arith.addf %239, %241 : vector<16x32xf32>
      %c0_92 = arith.constant 0 : index
      %c0_93 = arith.constant 0 : index
      %c0_94 = arith.constant 0 : index
      %243 = vector.load %arg15[%c0_92, %c0_93, %c0_94] : memref<1x16x32xf32, #tpu.memory_space<vmem>>, vector<1x16x32xf32>
      %244 = vector.shape_cast %243 : vector<1x16x32xf32> to vector<16x32xf32>
      %245 = vector.shape_cast %242 : vector<16x32xf32> to vector<1x16x32xf32>
      tpu.vector_store %arg15[%c0_92, %c0_93, %c0_94], %245 {strides = array<i32>} : memref<1x16x32xf32, #tpu.memory_space<vmem>>, vector<1x16x32xf32>,
    } else {
    }
    return
  }
  func.func @transform_0(%arg0: i32, %arg1: i32) -> (i32, i32, i32) {
    %c0_i32 = arith.constant 0 : i32
    %c0_i32_0 = arith.constant 0 : i32
    %c0_i32_1 = arith.constant 0 : i32
    return %arg0, %c0_i32, %c0_i32_0 : i32, i32, i32
  }
  func.func @transform_1(%arg0: i32, %arg1: i32) -> (i32, i32, i32) {
    %c0_i32 = arith.constant 0 : i32
    %c0_i32_0 = arith.constant 0 : i32
    %c0_i32_1 = arith.constant 0 : i32
    return %arg0, %c0_i32, %c0_i32_0 : i32, i32, i32
  }
  func.func @transform_2(%arg0: i32, %arg1: i32) -> (i32, i32, i32) {
    %c0_i32 = arith.constant 0 : i32
    %c0_i32_0 = arith.constant 0 : i32
    %c0_i32_1 = arith.constant 0 : i32
    return %arg0, %c0_i32, %c0_i32_0 : i32, i32, i32
  }
  func.func @transform_3(%arg0: i32, %arg1: i32) -> (i32, i32, i32) {
    %c0_i32 = arith.constant 0 : i32
    %c0_i32_0 = arith.constant 0 : i32
    %c0_i32_1 = arith.constant 0 : i32
    return %arg1, %c0_i32, %c0_i32_0 : i32, i32, i32
  }
  func.func @transform_4(%arg0: i32, %arg1: i32) -> (i32, i32, i32) {
    %c0_i32 = arith.constant 0 : i32
    %c0_i32_0 = arith.constant 0 : i32
    %c0_i32_1 = arith.constant 0 : i32
    return %arg1, %c0_i32, %c0_i32_0 : i32, i32, i32
  }
  func.func @transform_5(%arg0: i32, %arg1: i32) -> (i32, i32, i32) {
    %c0_i32 = arith.constant 0 : i32
    %c0_i32_0 = arith.constant 0 : i32
    %c0_i32_1 = arith.constant 0 : i32
    return %arg1, %c0_i32, %c0_i32_0 : i32, i32, i32
  }
  func.func @transform_6(%arg0: i32, %arg1: i32) -> (i32, i32, i32) {
    %c0_i32 = arith.constant 0 : i32
    %c0_i32_0 = arith.constant 0 : i32
    %c0_i32_1 = arith.constant 0 : i32
    return %arg1, %c0_i32, %c0_i32_0 : i32, i32, i32
  }
  func.func @transform_7(%arg0: i32, %arg1: i32) -> (i32, i32, i32) {
    %c0_i32 = arith.constant 0 : i32
    %c0_i32_0 = arith.constant 0 : i32
    %c0_i32_1 = arith.constant 0 : i32
    return %arg1, %c0_i32, %c0_i32_0 : i32, i32, i32
  }
  func.func @transform_8(%arg0: i32, %arg1: i32) -> (i32, i32, i32) {
    %c0_i32 = arith.constant 0 : i32
    %c0_i32_0 = arith.constant 0 : i32
    %c0_i32_1 = arith.constant 0 : i32
    return %arg1, %c0_i32, %c0_i32_0 : i32, i32, i32
  }
  func.func @transform_9(%arg0: i32, %arg1: i32) -> (i32, i32, i32) {
    %c0_i32 = arith.constant 0 : i32
    %c0_i32_0 = arith.constant 0 : i32
    %c0_i32_1 = arith.constant 0 : i32
    return %arg1, %c0_i32, %c0_i32_0 : i32, i32, i32
  }
  func.func @transform_10(%arg0: i32, %arg1: i32) -> (i32, i32) {
    %c0_i32 = arith.constant 0 : i32
    %c0_i32_0 = arith.constant 0 : i32
    %c0_i32_1 = arith.constant 0 : i32
    return %c0_i32, %c0_i32_0 : i32, i32
  }
  func.func @transform_11(%arg0: i32, %arg1: i32) -> (i32, i32) {
    %c0_i32 = arith.constant 0 : i32
    %c0_i32_0 = arith.constant 0 : i32
    %c0_i32_1 = arith.constant 0 : i32
    return %c0_i32, %c0_i32_0 : i32, i32
  }
  func.func @transform_12(%arg0: i32, %arg1: i32) -> (i32, i32) {
    %c0_i32 = arith.constant 0 : i32
    %c0_i32_0 = arith.constant 0 : i32
    %c0_i32_1 = arith.constant 0 : i32
    return %c0_i32, %c0_i32_0 : i32, i32
  }
  func.func @transform_13(%arg0: i32, %arg1: i32) -> (i32, i32, i32) {
    %c0_i32 = arith.constant 0 : i32
    %c0_i32_0 = arith.constant 0 : i32
    %c0_i32_1 = arith.constant 0 : i32
    return %arg0, %c0_i32, %c0_i32_0 : i32, i32, i32
  }
}

</mosaic_0001>

<llo_original>
// kernel: tpu_custom_call.1
$region0: #{tpu_custom_call.1}
  #allocation0 [shape = 'u32[]', space=smem, size = 0x4, offset = 0x4, fixed_abs, tag = 'smem constant byte address 0x4 - core index']
  #allocation1 [shape = 'u32[72,128]{1,0:T(1,128)}', space=vmem, size = 0x9000, scoped, tag = 'internal scratch']
  #allocation2 [shape = 'f32[16,32]{1,0:T(8,128)}', space=vmem, size = 0x2000, scoped, tag = 'scratch operand']
  %s0 = inlined_call_operand.vmem [shape: bf16[2,16,32], index: 0, kind: input, shape index: {}]
  %s1 = inlined_call_operand.vmem [shape: bf16[2,32,16], index: 1, kind: input, shape index: {}]
  %s2 = inlined_call_operand.vmem [shape: f32[2,16,16], index: 2, kind: input, shape index: {}]
  %s3 = inlined_call_operand.vmem [shape: bf16[4,32,8], index: 3, kind: input, shape index: {}]
  %s4 = inlined_call_operand.vmem [shape: f32[4,1,8], index: 4, kind: input, shape index: {}]
  %s5 = inlined_call_operand.vmem [shape: bf16[4,8,32], index: 5, kind: input, shape index: {}]
  %s6 = inlined_call_operand.vmem [shape: f32[4,8,1], index: 6, kind: input, shape index: {}]
  %s7 = inlined_call_operand.vmem [shape: bf16[4,8,32], index: 7, kind: input, shape index: {}]
  %s8 = inlined_call_operand.vmem [shape: f32[4,8,1], index: 8, kind: input, shape index: {}]
  %s9 = inlined_call_operand.vmem [shape: bf16[4,8,32], index: 9, kind: input, shape index: {}]
  %s10 = inlined_call_operand.vmem [shape: f32[1,32], index: 10, kind: input, shape index: {}]
  %s11 = inlined_call_operand.vmem [shape: bf16[8,9], index: 11, kind: input, shape index: {}]
  %s12 = inlined_call_operand.vmem [shape: f32[9,8], index: 12, kind: input, shape index: {}]
  %s13 = inlined_call_operand.hbm [shape: f32[2,16,32], index: 13, kind: output, shape index: {}]
  %s14 = sld [smem:[#allocation0]]
  $region93: #{tpu_custom_call.1} parent=0
    _
  %s16 = ssub.s32 1, %s14
  %s17 = scalar_select 0, %s16, %s14
  $region1: #{tpu_custom_call.1} parent=0
    #allocation3 [shape = 'u8[16384]{0}', space=vmem, size = 0x4000, scoped, tag = 'output window, operand 0']
    #allocation4 [shape = 's32[2]{0}', space=sflag, size = 0x8, scoped, tag = 'scoped memory for tpu_custom_call.1']
    %18 = vsyncpa [#allocation4], 0
    %s19 = scalar_lea.sflag [#allocation4], 1
    %20 = vsyncpa %s19, 0
    loop: start=0, step=1, limit=10
    $region2: #{tpu_custom_call.1} parent=1 // loop_pre_header
      _
    $region3: #{tpu_custom_call.1} parent=1 // loop_header
      %s22 = sphi 0, %s26
      %p23 = scmp.ge.s32.totalorder %s22, 10
      %s29 = sphi 0, %s41
      %s30 = sphi 0, %s37
      %s31 = sphi 0, %s29
      %s32 = sphi 0, %s30
      %s33 = sphi 0, %s31
      %s34 = sphi 0, %s32
      %s44 = sphi 0, %s46
      %s47 = sphi 0, %s44
      %s48 = sphi 0, %s47
      %s64 = sphi 0, %s48
      %s70 = sphi 0, %s72
      %s73 = sphi 0, %s70
      %s74 = sphi 0, %s73
      %s90 = sphi 0, %s74
      %s96 = sphi 0, %s98
      %s99 = sphi 0, %s96
      %s100 = sphi 0, %s99
      %s116 = sphi 0, %s100
      %s122 = sphi 0, %s124
      %s125 = sphi 0, %s122
      %s126 = sphi 0, %s125
      %s142 = sphi 0, %s126
      %s148 = sphi 0, %s150
      %s151 = sphi 0, %s148
      %s152 = sphi 0, %s151
      %s168 = sphi 0, %s152
      %s174 = sphi 0, %s176
      %s177 = sphi 0, %s174
      %s178 = sphi 0, %s177
      %s194 = sphi 0, %s178
      %s200 = sphi 0, %s202
      %s203 = sphi 0, %s200
      %s204 = sphi 0, %s203
      %s220 = sphi 0, %s204
      %s226 = sphi 0, %s228
      %s229 = sphi 0, %s226
      %s230 = sphi 0, %s229
      %s246 = sphi 0, %s230
      %s252 = sphi 0, %s254
      %s255 = sphi 0, %s252
      %s256 = sphi 0, %s255
      %s272 = sphi 0, %s256
      %s278 = sphi 0, %s280
      %s281 = sphi 0, %s278
      %s282 = sphi 0, %s281
      %s298 = sphi 0, %s282
      %s302 = sphi 0, %s302
      %s304 = sphi 0, %s302
      %s305 = sphi 0, %s304
      %s319 = sphi 0, %s305
      %s323 = sphi 0, %s323
      %s325 = sphi 0, %s323
      %s326 = sphi 0, %s325
      %s340 = sphi 0, %s326
      %s344 = sphi 0, %s344
      %s346 = sphi 0, %s344
      %s347 = sphi 0, %s346
      %s361 = sphi 0, %s347
      %s367 = sphi 0, %s369
      %s370 = sphi 0, %s367
      %s371 = sphi 0, %s370
      %s387 = sphi 0, %s371
    $region4: #{tpu_custom_call.1} parent=1 // loop_header_branch
      %25 = sbr.rel (%p23) target = $region8
    $region5: #{tpu_custom_call.1} parent=1 // loop_body
      %s27 = ssub.s32 %s22, 1
      %s28 = ssub.s32 %s22, 2
      %s35 = sadd.s32 1, %s30
      %p36 = scmp.ge.s32.totalorder %s35, 4
      %s37 = scalar_select %p36, 0, %s35
      %s38 = sadd.s32 1, %s29
      %s39 = scalar_select %p36, %s38, %s29
      %p40 = scmp.ge.s32.totalorder %s39, 2
      %s41 = scalar_select %p40, 0, %s39
      %s42 = ssub.s32 %s29, %s41
      %p43 = scmp.eq.s32.totalorder %s42, 0
      %s45 = sadd.s32 %s44, 1
      %s46 = scalar_select %p43, %s44, %s45
      %p49 = pneg %p43
      %p50 = scmp.eq.s32.totalorder %s22, 7
      %p51 = por %p49, %p50
      %p52 = scmp.ne.s32.totalorder %s44, %s47
      %p53 = scmp.eq.s32.totalorder %s22, 0
      %p54 = por %p52, %p53
      %p55 = scmp.ne.s32.totalorder %s44, %s47
      %p56 = scmp.eq.s32.totalorder %s27, 7
      %p57 = por %p55, %p56
      %p58 = scmp.ne.s32.totalorder %s47, %s48
      %p59 = scmp.eq.s32.totalorder %s27, 0
      %p60 = por %p58, %p59
      %p61 = scmp.ne.s32.totalorder %s47, %s48
      %p62 = scmp.eq.s32.totalorder %s28, 7
      %p63 = por %p61, %p62
      %p65 = scmp.ne.s32.totalorder %s48, %s64
      %p66 = scmp.eq.s32.totalorder %s28, 0
      %p67 = por %p65, %p66
      %s68 = ssub.s32 %s29, %s41
      %p69 = scmp.eq.s32.totalorder %s68, 0
      %s71 = sadd.s32 %s70, 1
      %s72 = scalar_select %p69, %s70, %s71
      %p75 = pneg %p69
      %p76 = scmp.eq.s32.totalorder %s22, 7
      %p77 = por %p75, %p76
      %p78 = scmp.ne.s32.totalorder %s70, %s73
      %p79 = scmp.eq.s32.totalorder %s22, 0
      %p80 = por %p78, %p79
      %p81 = scmp.ne.s32.totalorder %s70, %s73
      %p82 = scmp.eq.s32.totalorder %s27, 7
      %p83 = por %p81, %p82
      %p84 = scmp.ne.s32.totalorder %s73, %s74
      %p85 = scmp.eq.s32.totalorder %s27, 0
      %p86 = por %p84, %p85
      %p87 = scmp.ne.s32.totalorder %s73, %s74
      %p88 = scmp.eq.s32.totalorder %s28, 7
      %p89 = por %p87, %p88
      %p91 = scmp.ne.s32.totalorder %s74, %s90
      %p92 = scmp.eq.s32.totalorder %s28, 0
      %p93 = por %p91, %p92
      %s94 = ssub.s32 %s29, %s41
      %p95 = scmp.eq.s32.totalorder %s94, 0
      %s97 = sadd.s32 %s96, 1
      %s98 = scalar_select %p95, %s96, %s97
      %p101 = pneg %p95
      %p102 = scmp.eq.s32.totalorder %s22, 7
      %p103 = por %p101, %p102
      %p104 = scmp.ne.s32.totalorder %s96, %s99
      %p105 = scmp.eq.s32.totalorder %s22, 0
      %p106 = por %p104, %p105
      %p107 = scmp.ne.s32.totalorder %s96, %s99
      %p108 = scmp.eq.s32.totalorder %s27, 7
      %p109 = por %p107, %p108
      %p110 = scmp.ne.s32.totalorder %s99, %s100
      %p111 = scmp.eq.s32.totalorder %s27, 0
      %p112 = por %p110, %p111
      %p113 = scmp.ne.s32.totalorder %s99, %s100
      %p114 = scmp.eq.s32.totalorder %s28, 7
      %p115 = por %p113, %p114
      %p117 = scmp.ne.s32.totalorder %s100, %s116
      %p118 = scmp.eq.s32.totalorder %s28, 0
      %p119 = por %p117, %p118
      %s120 = ssub.s32 %s30, %s37
      %p121 = scmp.eq.s32.totalorder %s120, 0
      %s123 = sadd.s32 %s122, 1
      %s124 = scalar_select %p121, %s122, %s123
      %p127 = pneg %p121
      %p128 = scmp.eq.s32.totalorder %s22, 7
      %p129 = por %p127, %p128
      %p130 = scmp.ne.s32.totalorder %s122, %s125
      %p131 = scmp.eq.s32.totalorder %s22, 0
      %p132 = por %p130, %p131
      %p133 = scmp.ne.s32.totalorder %s122, %s125
      %p134 = scmp.eq.s32.totalorder %s27, 7
      %p135 = por %p133, %p134
      %p136 = scmp.ne.s32.totalorder %s125, %s126
      %p137 = scmp.eq.s32.totalorder %s27, 0
      %p138 = por %p136, %p137
      %p139 = scmp.ne.s32.totalorder %s125, %s126
      %p140 = scmp.eq.s32.totalorder %s28, 7
      %p141 = por %p139, %p140
      %p143 = scmp.ne.s32.totalorder %s126, %s142
      %p144 = scmp.eq.s32.totalorder %s28, 0
      %p145 = por %p143, %p144
      %s146 = ssub.s32 %s30, %s37
      %p147 = scmp.eq.s32.totalorder %s146, 0
      %s149 = sadd.s32 %s148, 1
      %s150 = scalar_select %p147, %s148, %s149
      %p153 = pneg %p147
      %p154 = scmp.eq.s32.totalorder %s22, 7
      %p155 = por %p153, %p154
      %p156 = scmp.ne.s32.totalorder %s148, %s151
      %p157 = scmp.eq.s32.totalorder %s22, 0
      %p158 = por %p156, %p157
      %p159 = scmp.ne.s32.totalorder %s148, %s151
      %p160 = scmp.eq.s32.totalorder %s27, 7
      %p161 = por %p159, %p160
      %p162 = scmp.ne.s32.totalorder %s151, %s152
      %p163 = scmp.eq.s32.totalorder %s27, 0
      %p164 = por %p162, %p163
      %p165 = scmp.ne.s32.totalorder %s151, %s152
      %p166 = scmp.eq.s32.totalorder %s28, 7
      %p167 = por %p165, %p166
      %p169 = scmp.ne.s32.totalorder %s152, %s168
      %p170 = scmp.eq.s32.totalorder %s28, 0
      %p171 = por %p169, %p170
      %s172 = ssub.s32 %s30, %s37
      %p173 = scmp.eq.s32.totalorder %s172, 0
      %s175 = sadd.s32 %s174, 1
      %s176 = scalar_select %p173, %s174, %s175
      %p179 = pneg %p173
      %p180 = scmp.eq.s32.totalorder %s22, 7
      %p181 = por %p179, %p180
      %p182 = scmp.ne.s32.totalorder %s174, %s177
      %p183 = scmp.eq.s32.totalorder %s22, 0
      %p184 = por %p182, %p183
      %p185 = scmp.ne.s32.totalorder %s174, %s177
      %p186 = scmp.eq.s32.totalorder %s27, 7
      %p187 = por %p185, %p186
      %p188 = scmp.ne.s32.totalorder %s177, %s178
      %p189 = scmp.eq.s32.totalorder %s27, 0
      %p190 = por %p188, %p189
      %p191 = scmp.ne.s32.totalorder %s177, %s178
      %p192 = scmp.eq.s32.totalorder %s28, 7
      %p193 = por %p191, %p192
      %p195 = scmp.ne.s32.totalorder %s178, %s194
      %p196 = scmp.eq.s32.totalorder %s28, 0
      %p197 = por %p195, %p196
      %s198 = ssub.s32 %s30, %s37
      %p199 = scmp.eq.s32.totalorder %s198, 0
      %s201 = sadd.s32 %s200, 1
      %s202 = scalar_select %p199, %s200, %s201
      %p205 = pneg %p199
      %p206 = scmp.eq.s32.totalorder %s22, 7
      %p207 = por %p205, %p206
      %p208 = scmp.ne.s32.totalorder %s200, %s203
      %p209 = scmp.eq.s32.totalorder %s22, 0
      %p210 = por %p208, %p209
      %p211 = scmp.ne.s32.totalorder %s200, %s203
      %p212 = scmp.eq.s32.totalorder %s27, 7
      %p213 = por %p211, %p212
      %p214 = scmp.ne.s32.totalorder %s203, %s204
      %p215 = scmp.eq.s32.totalorder %s27, 0
      %p216 = por %p214, %p215
      %p217 = scmp.ne.s32.totalorder %s203, %s204
      %p218 = scmp.eq.s32.totalorder %s28, 7
      %p219 = por %p217, %p218
      %p221 = scmp.ne.s32.totalorder %s204, %s220
      %p222 = scmp.eq.s32.totalorder %s28, 0
      %p223 = por %p221, %p222
      %s224 = ssub.s32 %s30, %s37
      %p225 = scmp.eq.s32.totalorder %s224, 0
      %s227 = sadd.s32 %s226, 1
      %s228 = scalar_select %p225, %s226, %s227
      %p231 = pneg %p225
      %p232 = scmp.eq.s32.totalorder %s22, 7
      %p233 = por %p231, %p232
      %p234 = scmp.ne.s32.totalorder %s226, %s229
      %p235 = scmp.eq.s32.totalorder %s22, 0
      %p236 = por %p234, %p235
      %p237 = scmp.ne.s32.totalorder %s226, %s229
      %p238 = scmp.eq.s32.totalorder %s27, 7
      %p239 = por %p237, %p238
      %p240 = scmp.ne.s32.totalorder %s229, %s230
      %p241 = scmp.eq.s32.totalorder %s27, 0
      %p242 = por %p240, %p241
      %p243 = scmp.ne.s32.totalorder %s229, %s230
      %p244 = scmp.eq.s32.totalorder %s28, 7
      %p245 = por %p243, %p244
      %p247 = scmp.ne.s32.totalorder %s230, %s246
      %p248 = scmp.eq.s32.totalorder %s28, 0
      %p249 = por %p247, %p248
      %s250 = ssub.s32 %s30, %s37
      %p251 = scmp.eq.s32.totalorder %s250, 0
      %s253 = sadd.s32 %s252, 1
      %s254 = scalar_select %p251, %s252, %s253
      %p257 = pneg %p251
      %p258 = scmp.eq.s32.totalorder %s22, 7
      %p259 = por %p257, %p258
      %p260 = scmp.ne.s32.totalorder %s252, %s255
      %p261 = scmp.eq.s32.totalorder %s22, 0
      %p262 = por %p260, %p261
      %p263 = scmp.ne.s32.totalorder %s252, %s255
      %p264 = scmp.eq.s32.totalorder %s27, 7
      %p265 = por %p263, %p264
      %p266 = scmp.ne.s32.totalorder %s255, %s256
      %p267 = scmp.eq.s32.totalorder %s27, 0
      %p268 = por %p266, %p267
      %p269 = scmp.ne.s32.totalorder %s255, %s256
      %p270 = scmp.eq.s32.totalorder %s28, 7
      %p271 = por %p269, %p270
      %p273 = scmp.ne.s32.totalorder %s256, %s272
      %p274 = scmp.eq.s32.totalorder %s28, 0
      %p275 = por %p273, %p274
      %s276 = ssub.s32 %s30, %s37
      %p277 = scmp.eq.s32.totalorder %s276, 0
      %s279 = sadd.s32 %s278, 1
      %s280 = scalar_select %p277, %s278, %s279
      %p283 = pneg %p277
      %p284 = scmp.eq.s32.totalorder %s22, 7
      %p285 = por %p283, %p284
      %p286 = scmp.ne.s32.totalorder %s278, %s281
      %p287 = scmp.eq.s32.totalorder %s22, 0
      %p288 = por %p286, %p287
      %p289 = scmp.ne.s32.totalorder %s278, %s281
      %p290 = scmp.eq.s32.totalorder %s27, 7
      %p291 = por %p289, %p290
      %p292 = scmp.ne.s32.totalorder %s281, %s282
      %p293 = scmp.eq.s32.totalorder %s27, 0
      %p294 = por %p292, %p293
      %p295 = scmp.ne.s32.totalorder %s281, %s282
      %p296 = scmp.eq.s32.totalorder %s28, 7
      %p297 = por %p295, %p296
      %p299 = scmp.ne.s32.totalorder %s282, %s298
      %p300 = scmp.eq.s32.totalorder %s28, 0
      %p301 = por %p299, %p300
      %s303 = sadd.s32 %s302, 1
      %p306 = scmp.eq.s32.totalorder %s22, 7
      %p307 = scmp.ne.s32.totalorder %s302, %s304
      %p308 = scmp.eq.s32.totalorder %s22, 0
      %p309 = por %p307, %p308
      %p310 = scmp.ne.s32.totalorder %s302, %s304
      %p311 = scmp.eq.s32.totalorder %s27, 7
      %p312 = por %p310, %p311
      %p313 = scmp.ne.s32.totalorder %s304, %s305
      %p314 = scmp.eq.s32.totalorder %s27, 0
      %p315 = por %p313, %p314
      %p316 = scmp.ne.s32.totalorder %s304, %s305
      %p317 = scmp.eq.s32.totalorder %s28, 7
      %p318 = por %p316, %p317
      %p320 = scmp.ne.s32.totalorder %s305, %s319
      %p321 = scmp.eq.s32.totalorder %s28, 0
      %p322 = por %p320, %p321
      %s324 = sadd.s32 %s323, 1
      %p327 = scmp.eq.s32.totalorder %s22, 7
      %p328 = scmp.ne.s32.totalorder %s323, %s325
      %p329 = scmp.eq.s32.totalorder %s22, 0
      %p330 = por %p328, %p329
      %p331 = scmp.ne.s32.totalorder %s323, %s325
      %p332 = scmp.eq.s32.totalorder %s27, 7
      %p333 = por %p331, %p332
      %p334 = scmp.ne.s32.totalorder %s325, %s326
      %p335 = scmp.eq.s32.totalorder %s27, 0
      %p336 = por %p334, %p335
      %p337 = scmp.ne.s32.totalorder %s325, %s326
      %p338 = scmp.eq.s32.totalorder %s28, 7
      %p339 = por %p337, %p338
      %p341 = scmp.ne.s32.totalorder %s326, %s340
      %p342 = scmp.eq.s32.totalorder %s28, 0
      %p343 = por %p341, %p342
      %s345 = sadd.s32 %s344, 1
      %p348 = scmp.eq.s32.totalorder %s22, 7
      %p349 = scmp.ne.s32.totalorder %s344, %s346
      %p350 = scmp.eq.s32.totalorder %s22, 0
      %p351 = por %p349, %p350
      %p352 = scmp.ne.s32.totalorder %s344, %s346
      %p353 = scmp.eq.s32.totalorder %s27, 7
      %p354 = por %p352, %p353
      %p355 = scmp.ne.s32.totalorder %s346, %s347
      %p356 = scmp.eq.s32.totalorder %s27, 0
      %p357 = por %p355, %p356
      %p358 = scmp.ne.s32.totalorder %s346, %s347
      %p359 = scmp.eq.s32.totalorder %s28, 7
      %p360 = por %p358, %p359
      %p362 = scmp.ne.s32.totalorder %s347, %s361
      %p363 = scmp.eq.s32.totalorder %s28, 0
      %p364 = por %p362, %p363
      %s365 = ssub.s32 %s29, %s41
      %p366 = scmp.eq.s32.totalorder %s365, 0
      %s368 = sadd.s32 %s367, 1
      %s369 = scalar_select %p366, %s367, %s368
      %p372 = pneg %p366
      %p373 = scmp.eq.s32.totalorder %s22, 7
      %p374 = por %p372, %p373
      %p375 = scmp.ne.s32.totalorder %s367, %s370
      %p376 = scmp.eq.s32.totalorder %s22, 0
      %p377 = por %p375, %p376
      %p378 = scmp.ne.s32.totalorder %s367, %s370
      %p379 = scmp.eq.s32.totalorder %s27, 7
      %p380 = por %p378, %p379
      %p381 = scmp.ne.s32.totalorder %s370, %s371
      %p382 = scmp.eq.s32.totalorder %s27, 0
      %p383 = por %p381, %p382
      %p384 = scmp.ne.s32.totalorder %s370, %s371
      %p385 = scmp.eq.s32.totalorder %s28, 7
      %p386 = por %p384, %p385
      %p388 = scmp.ne.s32.totalorder %s371, %s387
      %p389 = scmp.eq.s32.totalorder %s28, 0
      %p390 = por %p388, %p389
      %p391 = scmp.le.s32.totalorder 1, %s22
      %p392 = scmp.lt.s32.totalorder %s22, 9
      %p393 = pnand %p391, %p392
      %p394 = pneg %p393
      // Predicated region
      $region9: #{tpu_custom_call.1} parent=5 // pred_check
        _
      $region10: #{tpu_custom_call.1} parent=5 // pred_check_branch
        %396 = sbr.rel (%p393) target = $region12
      $region11: #{tpu_custom_call.1} parent=5 // pred_region
        %s397 = ssub.s32 %s22, 1
        // Predicated region
        $region13: #{tpu_custom_call.1} parent=11 // pred_check
          %p398 = pneg %p315
        $region14: #{tpu_custom_call.1} parent=11 // pred_check_branch
          %400 = sbr.rel (%p398) target = $region16
        $region15: #{tpu_custom_call.1} parent=11 // pred_region
          _
        $region16: #{tpu_custom_call.1} parent=11 // pred_fallthru
          _
        // Predicated region
        $region17: #{tpu_custom_call.1} parent=11 // pred_check
          %p401 = pneg %p336
        $region18: #{tpu_custom_call.1} parent=11 // pred_check_branch
          %403 = sbr.rel (%p401) target = $region20
        $region19: #{tpu_custom_call.1} parent=11 // pred_region
          _
        $region20: #{tpu_custom_call.1} parent=11 // pred_fallthru
          _
        // Predicated region
        $region21: #{tpu_custom_call.1} parent=11 // pred_check
          %p404 = pneg %p357
        $region22: #{tpu_custom_call.1} parent=11 // pred_check_branch
          %406 = sbr.rel (%p404) target = $region24
        $region23: #{tpu_custom_call.1} parent=11 // pred_region
          _
        $region24: #{tpu_custom_call.1} parent=11 // pred_fallthru
          _
      $region12: #{tpu_custom_call.1} parent=5 // pred_fallthru
        _
      %p407 = scmp.lt.s32.totalorder %s22, 8
      // Predicated region
      $region25: #{tpu_custom_call.1} parent=5 // pred_check
        %p408 = pneg %p407
      $region26: #{tpu_custom_call.1} parent=5 // pred_check_branch
        %410 = sbr.rel (%p408) target = $region28
      $region27: #{tpu_custom_call.1} parent=5 // pred_region
        // Predicated region
        $region29: #{tpu_custom_call.1} parent=27 // pred_check
          %p411 = pneg %p54
        $region30: #{tpu_custom_call.1} parent=27 // pred_check_branch
          %413 = sbr.rel (%p411) target = $region32
        $region31: #{tpu_custom_call.1} parent=27 // pred_region
          %p414 = scmp.lt.s32.totalorder %s29, 1
          %s415 = scalar_select %p414, %s29, 1
          %s416 = smul.addr %s415, 2
          %s417 = smul.addr %s416, 4
          %s418 = scalar_lea.vmem %s0, %s417
        $region32: #{tpu_custom_call.1} parent=27 // pred_fallthru
          _
        // Predicated region
        $region33: #{tpu_custom_call.1} parent=27 // pred_check
          %p419 = pneg %p80
        $region34: #{tpu_custom_call.1} parent=27 // pred_check_branch
          %421 = sbr.rel (%p419) target = $region36
        $region35: #{tpu_custom_call.1} parent=27 // pred_region
          %p422 = scmp.lt.s32.totalorder %s29, 1
          %s423 = scalar_select %p422, %s29, 1
          %s424 = smul.addr %s423, 4
          %s425 = smul.addr %s424, 4
          %s426 = scalar_lea.vmem %s1, %s425
        $region36: #{tpu_custom_call.1} parent=27 // pred_fallthru
          _
        // Predicated region
        $region37: #{tpu_custom_call.1} parent=27 // pred_check
          %p427 = pneg %p106
        $region38: #{tpu_custom_call.1} parent=27 // pred_check_branch
          %429 = sbr.rel (%p427) target = $region40
        $region39: #{tpu_custom_call.1} parent=27 // pred_region
          %p430 = scmp.lt.s32.totalorder %s29, 1
          %s431 = scalar_select %p430, %s29, 1
          %s432 = smul.addr %s431, 2
          %s433 = smul.addr %s432, 8
          %s434 = scalar_lea.vmem %s2, %s433
        $region40: #{tpu_custom_call.1} parent=27 // pred_fallthru
          _
        // Predicated region
        $region41: #{tpu_custom_call.1} parent=27 // pred_check
          %p435 = pneg %p132
        $region42: #{tpu_custom_call.1} parent=27 // pred_check_branch
          %437 = sbr.rel (%p435) target = $region44
        $region43: #{tpu_custom_call.1} parent=27 // pred_region
          %p438 = scmp.lt.s32.totalorder %s30, 3
          %s439 = scalar_select %p438, %s30, 3
          %s440 = smul.addr %s439, 4
          %s441 = smul.addr %s440, 4
          %s442 = scalar_lea.vmem %s3, %s441
        $region44: #{tpu_custom_call.1} parent=27 // pred_fallthru
          _
        // Predicated region
        $region45: #{tpu_custom_call.1} parent=27 // pred_check
          %p443 = pneg %p158
        $region46: #{tpu_custom_call.1} parent=27 // pred_check_branch
          %445 = sbr.rel (%p443) target = $region48
        $region47: #{tpu_custom_call.1} parent=27 // pred_region
          %p446 = scmp.lt.s32.totalorder %s30, 3
          %s447 = scalar_select %p446, %s30, 3
          %s448 = scalar_lea.vmem %s4, %s447
        $region48: #{tpu_custom_call.1} parent=27 // pred_fallthru
          _
        // Predicated region
        $region49: #{tpu_custom_call.1} parent=27 // pred_check
          %p449 = pneg %p184
        $region50: #{tpu_custom_call.1} parent=27 // pred_check_branch
          %451 = sbr.rel (%p449) target = $region52
        $region51: #{tpu_custom_call.1} parent=27 // pred_region
          %p452 = scmp.lt.s32.totalorder %s30, 3
          %s453 = scalar_select %p452, %s30, 3
          %s454 = smul.addr %s453, 4
          %s455 = scalar_lea.vmem %s5, %s454
        $region52: #{tpu_custom_call.1} parent=27 // pred_fallthru
          _
        // Predicated region
        $region53: #{tpu_custom_call.1} parent=27 // pred_check
          %p456 = pneg %p210
        $region54: #{tpu_custom_call.1} parent=27 // pred_check_branch
          %458 = sbr.rel (%p456) target = $region56
        $region55: #{tpu_custom_call.1} parent=27 // pred_region
          %p459 = scmp.lt.s32.totalorder %s30, 3
          %s460 = scalar_select %p459, %s30, 3
          %s461 = smul.addr %s460, 8
          %s462 = scalar_lea.vmem %s6, %s461
        $region56: #{tpu_custom_call.1} parent=27 // pred_fallthru
          _
        // Predicated region
        $region57: #{tpu_custom_call.1} parent=27 // pred_check
          %p463 = pneg %p236
        $region58: #{tpu_custom_call.1} parent=27 // pred_check_branch
          %465 = sbr.rel (%p463) target = $region60
        $region59: #{tpu_custom_call.1} parent=27 // pred_region
          %p466 = scmp.lt.s32.totalorder %s30, 3
          %s467 = scalar_select %p466, %s30, 3
          %s468 = smul.addr %s467, 4
          %s469 = scalar_lea.vmem %s7, %s468
        $region60: #{tpu_custom_call.1} parent=27 // pred_fallthru
          _
        // Predicated region
        $region61: #{tpu_custom_call.1} parent=27 // pred_check
          %p470 = pneg %p262
        $region62: #{tpu_custom_call.1} parent=27 // pred_check_branch
          %472 = sbr.rel (%p470) target = $region64
        $region63: #{tpu_custom_call.1} parent=27 // pred_region
          %p473 = scmp.lt.s32.totalorder %s30, 3
          %s474 = scalar_select %p473, %s30, 3
          %s475 = smul.addr %s474, 8
          %s476 = scalar_lea.vmem %s8, %s475
        $region64: #{tpu_custom_call.1} parent=27 // pred_fallthru
          _
        // Predicated region
        $region65: #{tpu_custom_call.1} parent=27 // pred_check
          %p477 = pneg %p288
        $region66: #{tpu_custom_call.1} parent=27 // pred_check_branch
          %479 = sbr.rel (%p477) target = $region68
        $region67: #{tpu_custom_call.1} parent=27 // pred_region
          %p480 = scmp.lt.s32.totalorder %s30, 3
          %s481 = scalar_select %p480, %s30, 3
          %s482 = smul.addr %s481, 4
          %s483 = scalar_lea.vmem %s9, %s482
        $region68: #{tpu_custom_call.1} parent=27 // pred_fallthru
          _
      $region28: #{tpu_custom_call.1} parent=5 // pred_fallthru
        _
      %p484 = scmp.le.s32.totalorder 1, %s22
      %p485 = scmp.lt.s32.totalorder %s22, 9
      %p486 = pnand %p484, %p485
      %p487 = pneg %p486
      // Predicated region
      $region69: #{tpu_custom_call.1} parent=5 // pred_check
        _
      $region70: #{tpu_custom_call.1} parent=5 // pred_check_branch
        %489 = sbr.rel (%p486) target = $region72
      $region71: #{tpu_custom_call.1} parent=5 // pred_region
        %s490 = ssub.s32 %s22, 1
        %p491 = scmp.lt.s32.totalorder %s31, 1
        %s492 = scalar_select %p491, %s31, 1
        %s493 = smul.addr %s492, 2
        %s494 = smul.addr %s493, 4
        %s495 = scalar_lea.vmem %s0, %s494
        %p496 = pneg %p60
        %p497 = pneg %p57
        %p498 = scmp.lt.s32.totalorder %s31, 1
        %s499 = scalar_select %p498, %s31, 1
        %s500 = smul.addr %s499, 4
        %s501 = smul.addr %s500, 4
        %s502 = scalar_lea.vmem %s1, %s501
        %p503 = pneg %p86
        %p504 = pneg %p83
        %p505 = scmp.lt.s32.totalorder %s31, 1
        %s506 = scalar_select %p505, %s31, 1
        %s507 = smul.addr %s506, 2
        %s508 = smul.addr %s507, 8
        %s509 = scalar_lea.vmem %s2, %s508
        %p510 = pneg %p112
        %p511 = pneg %p109
        %p512 = scmp.lt.s32.totalorder %s32, 3
        %s513 = scalar_select %p512, %s32, 3
        %s514 = smul.addr %s513, 4
        %s515 = smul.addr %s514, 4
        %s516 = scalar_lea.vmem %s3, %s515
        %p517 = pneg %p138
        %p518 = pneg %p135
        %p519 = scmp.lt.s32.totalorder %s32, 3
        %s520 = scalar_select %p519, %s32, 3
        %s521 = scalar_lea.vmem %s4, %s520
        %p522 = pneg %p164
        %p523 = pneg %p161
        %p524 = scmp.lt.s32.totalorder %s32, 3
        %s525 = scalar_select %p524, %s32, 3
        %s526 = smul.addr %s525, 4
        %s527 = scalar_lea.vmem %s5, %s526
        %p528 = pneg %p190
        %p529 = pneg %p187
        %p530 = scmp.lt.s32.totalorder %s32, 3
        %s531 = scalar_select %p530, %s32, 3
        %s532 = smul.addr %s531, 8
        %s533 = scalar_lea.vmem %s6, %s532
        %p534 = pneg %p216
        %p535 = pneg %p213
        %p536 = scmp.lt.s32.totalorder %s32, 3
        %s537 = scalar_select %p536, %s32, 3
        %s538 = smul.addr %s537, 4
        %s539 = scalar_lea.vmem %s7, %s538
        %p540 = pneg %p242
        %p541 = pneg %p239
        %p542 = scmp.lt.s32.totalorder %s32, 3
        %s543 = scalar_select %p542, %s32, 3
        %s544 = smul.addr %s543, 8
        %s545 = scalar_lea.vmem %s8, %s544
        %p546 = pneg %p268
        %p547 = pneg %p265
        %p548 = scmp.lt.s32.totalorder %s32, 3
        %s549 = scalar_select %p548, %s32, 3
        %s550 = smul.addr %s549, 4
        %s551 = scalar_lea.vmem %s9, %s550
        %p552 = pneg %p294
        %p553 = pneg %p291
        %p554 = pneg %p315
        %p555 = pneg %p312
        %p556 = pneg %p336
        %p557 = pneg %p333
        %p558 = pneg %p357
        %p559 = pneg %p354
        %p560 = pneg %p383
        %p561 = pneg %p380
        %s562 = sand.u32 %s370, 1
        %s563 = scalar_lea.sflag [#allocation4], %s562
        %s564 = sand.u32 %s370, 1
        %s565 = smul.addr %s564, 16
        %s566 = scalar_lea.vmem [#allocation3], %s565
        %p567 = scmp.lt.s32.totalorder %s31, 1
        %s568 = scalar_select %p567, %s31, 1
        %s569 = smul.addr %s568, 2
        %s570 = smul.addr %s569, 4
        %s571 = scalar_lea.vmem %s0, %s570
        %p572 = scmp.lt.s32.totalorder %s31, 1
        %s573 = scalar_select %p572, %s31, 1
        %s574 = smul.addr %s573, 4
        %s575 = smul.addr %s574, 4
        %s576 = scalar_lea.vmem %s1, %s575
        %p577 = scmp.lt.s32.totalorder %s31, 1
        %s578 = scalar_select %p577, %s31, 1
        %s579 = smul.addr %s578, 2
        %s580 = smul.addr %s579, 8
        %s581 = scalar_lea.vmem %s2, %s580
        %p582 = scmp.lt.s32.totalorder %s32, 3
        %s583 = scalar_select %p582, %s32, 3
        %s584 = smul.addr %s583, 4
        %s585 = smul.addr %s584, 4
        %s586 = scalar_lea.vmem %s3, %s585
        %p587 = scmp.lt.s32.totalorder %s32, 3
        %s588 = scalar_select %p587, %s32, 3
        %s589 = scalar_lea.vmem %s4, %s588
        %p590 = scmp.lt.s32.totalorder %s32, 3
        %s591 = scalar_select %p590, %s32, 3
        %s592 = smul.addr %s591, 4
        %s593 = scalar_lea.vmem %s5, %s592
        %p594 = scmp.lt.s32.totalorder %s32, 3
        %s595 = scalar_select %p594, %s32, 3
        %s596 = smul.addr %s595, 8
        %s597 = scalar_lea.vmem %s6, %s596
        %p598 = scmp.lt.s32.totalorder %s32, 3
        %s599 = scalar_select %p598, %s32, 3
        %s600 = smul.addr %s599, 4
        %s601 = scalar_lea.vmem %s7, %s600
        %p602 = scmp.lt.s32.totalorder %s32, 3
        %s603 = scalar_select %p602, %s32, 3
        %s604 = smul.addr %s603, 8
        %s605 = scalar_lea.vmem %s8, %s604
        %p606 = scmp.lt.s32.totalorder %s32, 3
        %s607 = scalar_select %p606, %s32, 3
        %s608 = smul.addr %s607, 4
        %s609 = scalar_lea.vmem %s9, %s608
        %v611 = vld [vmem:[%s571] sm:$0xf]
        %v612 = vld [vmem:[%s571 + $0x4] sm:$0xf]
        %v613 = vld [vmem:[%s576] sm:$0xf]
        %v614 = vld [vmem:[%s576 + $0x4] sm:$0xf]
        %v615 = vld [vmem:[%s576 + $0x8] sm:$0xf]
        %v616 = vld [vmem:[%s576 + $0xc] sm:$0xf]
        %v617 = vld [vmem:[%s586] sm:$0xf]
        %v618 = vld [vmem:[%s586 + $0x4] sm:$0xf]
        %v619 = vld [vmem:[%s586 + $0x8] sm:$0xf]
        %v620 = vld [vmem:[%s586 + $0xc] sm:$0xf]
        %v621 = vld [vmem:[%s589] sm:$0x1]
        %v623 = vperm.slane %v621, 0
        %v627 = vunpack.c.l.b16 %v611
        %v628 = vunpack.c.l.b16 %v612
        %v629 = vpack.c.b16 %v628, %v627
        %v634 = vunpack.c.l.b16 %v617
        %v635 = vunpack.c.l.b16 %v618
        %v636 = vunpack.c.l.b16 %v619
        %v637 = vunpack.c.l.b16 %v620
        %v638 = vpack.c.b16 %v635, %v634
        %v639 = vpack.c.b16 %v637, %v636
        %vm642 = vcmask 261120
        %v644 = vsel %vm642, %v629, 0
        %646 = vmatpush.bf16.msra.mxu0 0
        %647 = vmatpush.bf16.msra.mxu0 0
        %648 = vmatpush.bf16.msra.mxu0 0
        %649 = vmatpush.bf16.msra.mxu0 0
        %650 = vmatpush.bf16.msra.mxu0 0
        %651 = vmatpush.bf16.msra.mxu0 0
        %652 = vmatpush.bf16.msra.mxu0 %v639
        %653 = vmatpush.bf16.msra.mxu0 %v638
        %654 = vmatmul.bf16.gmra.mxu0 %v644
        %v655 = vpop.f32.mrf.mxu0
        %v656 = vadd.f32 %v623, %v655
        %v657 = vpop.f32.mrf.mxu0
        %v658 = vadd.f32 %v623, %v657
        %659 = vdwg.mxu0
        %v660 = vmul.f32 %v656, 0.35355338
        %v661 = vmul.f32 %v658, 0.35355338
        %v662 = vld [vmem:[%s593] sm:$0xf]
        %v663 = vld [vmem:[%s597] sm:$0xff]
        %665 = vset.pattern.permute.xlu0 0
        %666 = vperm.xlu0 %665, %v663
        %v667 = vpop.permute.xlu0 %666
        %v673 = vunpack.c.l.b16 %v613
        %v674 = vunpack.c.l.b16 %v614
        %v675 = vunpack.c.l.b16 %v615
        %v676 = vunpack.c.l.b16 %v616
        %v677 = vpack.c.b16 %v674, %v673
        %v678 = vpack.c.b16 %v676, %v675
        %v682 = vsel %vm642, %v662, 0
        %684 = vmatpush.bf16.msra.mxu0 0
        %685 = vmatpush.bf16.msra.mxu0 0
        %686 = vmatpush.bf16.msra.mxu0 0
        %687 = vmatpush.bf16.msra.mxu0 0
        %688 = vmatpush.bf16.msra.mxu0 0
        %689 = vmatpush.bf16.msra.mxu0 0
        %690 = vmatpush.bf16.msra.mxu0 %v678
        %691 = vmatpush.bf16.msra.mxu0 %v677
        %692 = vmatmul.bf16.gmra.mxu0 %v682
        %v693 = vpop.f32.mrf.mxu0
        %v694 = vadd.f32 %v667, %v693
        %v695 = vpop.f32.mrf.mxu0
        %696 = vdwg.mxu0
        %v697 = vld [vmem:[%s601] sm:$0xf]
        %v698 = vld [vmem:[%s605] sm:$0xff]
        %700 = vset.pattern.permute.xlu0 0
        %701 = vperm.xlu0 %700, %v698
        %v702 = vpop.permute.xlu0 %701
        %v705 = vsel %vm642, %v697, 0
        %707 = vmatpush.bf16.msra.mxu0 0
        %708 = vmatpush.bf16.msra.mxu0 0
        %709 = vmatpush.bf16.msra.mxu0 0
        %710 = vmatpush.bf16.msra.mxu0 0
        %711 = vmatpush.bf16.msra.mxu0 0
        %712 = vmatpush.bf16.msra.mxu0 0
        %713 = vmatpush.bf16.msra.mxu0 %v678
        %714 = vmatpush.bf16.msra.mxu0 %v677
        %715 = vmatmul.bf16.gmra.mxu0 %v705
        %v716 = vpop.f32.mrf.mxu0
        %v717 = vadd.f32 %v702, %v716
        %v718 = vpop.f32.mrf.mxu0
        %719 = vdwg.mxu0
        %v720 = vpack.c.bf16 %v661, %v660
        %v721 = vpack.c.bf16 %v694, %v694
        %v722 = vld [vmem:[%s11] sm:$0xf]
        %vm723 = vcmask 64512
        %v725 = vsel %vm723, %v720, 0
        %vm727 = vcmask 1043456
        %v729 = vsel %vm727, %v722, 0
        %731 = vmatpush.bf16.msra.mxu0 0
        %732 = vmatpush.bf16.msra.mxu0 0
        %733 = vmatpush.bf16.msra.mxu0 0
        %734 = vmatpush.bf16.msra.mxu0 0
        %735 = vmatpush.bf16.msra.mxu0 0
        %736 = vmatpush.bf16.msra.mxu0 0
        %737 = vmatpush.bf16.msra.mxu0 0
        %738 = vmatpush.bf16.msra.mxu0 %v729
        %739 = vmatmul.bf16.gmra.mxu0 %v725
        %v740 = vpop.f32.mrf.mxu0
        %v741 = vadd.f32 0.0, %v740
        %v742 = vpop.f32.mrf.mxu0
        %v743 = vadd.f32 0.0, %v742
        %744 = vdwg.mxu0
        %v745 = vlaneseq
        %v746 = vshrl.u32 %v745, 7
        %v747 = vadd.s32 %v746, 8
        %v748 = vlaneseq
        %v749 = vand.u32 %v748, 127
        %v750 = vsub.s32 %v749, %v746
        %v751 = vsub.s32 %v749, %v747
        %vm752 = vcmp.eq.s32.totalorder %v750, 4294967292
        %vm753 = vcmp.eq.s32.totalorder %v751, 4294967292
        %755 = vset.pattern.permute.xlu0 0
        %756 = vperm.xlu0 %755, %v741
        %v757 = vpop.permute.xlu0 %756
        %760 = vset.pattern.permute.xlu0 0
        %761 = vperm.xlu0 %760, %v743
        %v762 = vpop.permute.xlu0 %761
        %v764 = vsel %vm752, %v757, 0.0
        %v765 = vsel %vm753, %v762, 0.0
        %v767 = vsel %vm727, %v721, 0
        %769 = vmatpush.bf16.msra.mxu0 0
        %770 = vmatpush.bf16.msra.mxu0 0
        %771 = vmatpush.bf16.msra.mxu0 0
        %772 = vmatpush.bf16.msra.mxu0 0
        %773 = vmatpush.bf16.msra.mxu0 0
        %774 = vmatpush.bf16.msra.mxu0 0
        %775 = vmatpush.bf16.msra.mxu0 0
        %776 = vmatpush.bf16.msra.mxu0 %v767
        %777 = vmatmul.bf16.gmra.mxu0 %v725
        %v778 = vpop.f32.mrf.mxu0
        %v779 = vadd.f32 %v764, %v778
        %v780 = vpop.f32.mrf.mxu0
        %v781 = vadd.f32 %v765, %v780
        %782 = vdwg.mxu0
        %vm783 = vcmp.eq.s32.totalorder %v750, 4294967293
        %vm784 = vcmp.eq.s32.totalorder %v751, 4294967293
        %785 = vset.pattern.permute.xlu0 1
        %786 = vperm.xlu0 %785, %v741
        %v787 = vpop.permute.xlu0 %786
        %789 = vset.pattern.permute.xlu0 1
        %790 = vperm.xlu0 %789, %v743
        %v791 = vpop.permute.xlu0 %790
        %v793 = vsel %vm783, %v787, 0.0
        %v794 = vsel %vm784, %v791, 0.0
        %v795 = vadd.f32 %v779, %v793
        %v796 = vadd.f32 %v781, %v794
        %vm797 = vcmp.eq.s32.totalorder %v750, 4294967294
        %vm798 = vcmp.eq.s32.totalorder %v751, 4294967294
        %799 = vset.pattern.permute.xlu0 2
        %800 = vperm.xlu0 %799, %v741
        %v801 = vpop.permute.xlu0 %800
        %803 = vset.pattern.permute.xlu0 2
        %804 = vperm.xlu0 %803, %v743
        %v805 = vpop.permute.xlu0 %804
        %v807 = vsel %vm797, %v801, 0.0
        %v808 = vsel %vm798, %v805, 0.0
        %v809 = vadd.f32 %v795, %v807
        %v810 = vadd.f32 %v796, %v808
        %vm811 = vcmp.eq.s32.totalorder %v750, 4294967295
        %vm812 = vcmp.eq.s32.totalorder %v751, 4294967295
        %813 = vset.pattern.permute.xlu0 3
        %814 = vperm.xlu0 %813, %v741
        %v815 = vpop.permute.xlu0 %814
        %817 = vset.pattern.permute.xlu0 3
        %818 = vperm.xlu0 %817, %v743
        %v819 = vpop.permute.xlu0 %818
        %v821 = vsel %vm811, %v815, 0.0
        %v822 = vsel %vm812, %v819, 0.0
        %v823 = vadd.f32 %v809, %v821
        %v824 = vadd.f32 %v810, %v822
        %vm825 = vcmp.eq.s32.totalorder %v750, 0
        %vm826 = vcmp.eq.s32.totalorder %v751, 0
        %827 = vset.pattern.permute.xlu0 4
        %828 = vperm.xlu0 %827, %v741
        %v829 = vpop.permute.xlu0 %828
        %831 = vset.pattern.permute.xlu0 4
        %832 = vperm.xlu0 %831, %v743
        %v833 = vpop.permute.xlu0 %832
        %v835 = vsel %vm825, %v829, 0.0
        %v836 = vsel %vm826, %v833, 0.0
        %v837 = vadd.f32 %v823, %v835
        %v838 = vadd.f32 %v824, %v836
        %vm839 = vcmp.eq.s32.totalorder %v750, 1
        %vm840 = vcmp.eq.s32.totalorder %v751, 1
        %841 = vset.pattern.permute.xlu0 5
        %842 = vperm.xlu0 %841, %v741
        %v843 = vpop.permute.xlu0 %842
        %845 = vset.pattern.permute.xlu0 5
        %846 = vperm.xlu0 %845, %v743
        %v847 = vpop.permute.xlu0 %846
        %v849 = vsel %vm839, %v843, 0.0
        %v850 = vsel %vm840, %v847, 0.0
        %v851 = vadd.f32 %v837, %v849
        %v852 = vadd.f32 %v838, %v850
        %vm853 = vcmp.eq.s32.totalorder %v750, 2
        %vm854 = vcmp.eq.s32.totalorder %v751, 2
        %855 = vset.pattern.permute.xlu0 6
        %856 = vperm.xlu0 %855, %v741
        %v857 = vpop.permute.xlu0 %856
        %859 = vset.pattern.permute.xlu0 6
        %860 = vperm.xlu0 %859, %v743
        %v861 = vpop.permute.xlu0 %860
        %v863 = vsel %vm853, %v857, 0.0
        %v864 = vsel %vm854, %v861, 0.0
        %v865 = vadd.f32 %v851, %v863
        %v866 = vadd.f32 %v852, %v864
        %vm867 = vcmp.eq.s32.totalorder %v750, 3
        %vm868 = vcmp.eq.s32.totalorder %v751, 3
        %869 = vset.pattern.permute.xlu0 7
        %870 = vperm.xlu0 %869, %v741
        %v871 = vpop.permute.xlu0 %870
        %873 = vset.pattern.permute.xlu0 7
        %874 = vperm.xlu0 %873, %v743
        %v875 = vpop.permute.xlu0 %874
        %v877 = vsel %vm867, %v871, 0.0
        %v878 = vsel %vm868, %v875, 0.0
        %v879 = vadd.f32 %v865, %v877
        %v880 = vadd.f32 %v866, %v878
        %vm881 = vcmp.eq.s32.totalorder %v750, 4
        %vm882 = vcmp.eq.s32.totalorder %v751, 4
        %883 = vset.pattern.permute.xlu0 8
        %884 = vperm.xlu0 %883, %v741
        %v885 = vpop.permute.xlu0 %884
        %887 = vset.pattern.permute.xlu0 8
        %888 = vperm.xlu0 %887, %v743
        %v889 = vpop.permute.xlu0 %888
        %v891 = vsel %vm881, %v885, 0.0
        %v892 = vsel %vm882, %v889, 0.0
        %v893 = vadd.f32 %v879, %v891
        %v894 = vadd.f32 %v880, %v892
        %v895 = vld [vmem:[%s581] sm:$0xff]
        %v896 = vld [vmem:[%s581 + $0x8] sm:$0xff]
        %vm897 = vcmp.eq.f32.partialorder %v895, 0.0
        %vm898 = vcmp.eq.f32.partialorder %v896, 0.0
        %v899 = vsel %vm897, -10000.0, %v893
        %v900 = vsel %vm898, -10000.0, %v894
        %vm901 = vcmask 130048
        %v902 = vsel %vm901, %v899, -inf
        %903 = vmax.xlane.f32.xlu0 %v902
        %v904 = vpop.xlane.xlu0 %903
        %v905 = vsel %vm901, %v900, -inf
        %906 = vmax.xlane.f32.xlu0 %v905
        %v907 = vpop.xlane.xlu0 %906
        %v908 = vsub.f32 %v899, %v904
        %v909 = vsub.f32 %v900, %v907
        %v910 = vmul.f32 %v908, 1.442695
        %v911 = vpow.pop %v910
        %v912 = vmul.f32 %v909, 1.442695
        %v913 = vpow.pop %v912
        %v914 = vsel %vm901, %v911, 0.0
        %915 = vadd.xlane.f32.xlu0 %v914
        %v916 = vpop.xlane.xlu0 %915
        %v917 = vsel %vm901, %v913, 0.0
        %918 = vadd.xlane.f32.xlu0 %v917
        %v919 = vpop.xlane.xlu0 %918
        %v920 = vrcp.pop %v916
        %v921 = vrcp.pop %v919
        %v922 = vmul.f32 %v911, %v920
        %v923 = vmul.f32 %v913, %v921
        %v924 = vpack.c.bf16 %v923, %v922
        %v925 = vpack.c.bf16 %v717, %v717
        %v926 = vld [vmem:[%s12] sm:$0xff]
        %v927 = vld [vmem:[%s12 + $0x8] sm:$0x1]
        %v928 = vsel %vm752, %v922, 0.0
        %v929 = vsel %vm753, %v923, 0.0
        %v930 = vsel %vm901, %v928, 0.0
        %931 = vadd.xlane.f32.xlu0 %v930
        %v932 = vpop.xlane.xlu0 %931
        %v933 = vsel %vm901, %v929, 0.0
        %934 = vadd.xlane.f32.xlu0 %v933
        %v935 = vpop.xlane.xlu0 %934
        %v936 = vperm.slane %v926, 0
        %v937 = vmul.f32 %v932, %v936
        %v938 = vmul.f32 %v935, %v936
        %v940 = vsel %vm901, %v924, 0
        %v943 = vsel %vm901, %v925, 0
        %945 = vmatpush.bf16.xpose.msra.mxu0 0
        %946 = vmatpush.bf16.xpose.msra.mxu0 0
        %947 = vmatpush.bf16.xpose.msra.mxu0 0
        %948 = vmatpush.bf16.xpose.msra.mxu0 0
        %949 = vmatpush.bf16.xpose.msra.mxu0 0
        %950 = vmatpush.bf16.xpose.msra.mxu0 0
        %951 = vmatpush.bf16.xpose.msra.mxu0 0
        %952 = vmatpush.bf16.xpose.msra.mxu0 %v943
        %953 = vmatmul.bf16.gmra.mxu0 %v940
        %v954 = vpop.f32.mrf.mxu0
        %v955 = vadd.f32 %v937, %v954
        %v956 = vpop.f32.mrf.mxu0
        %v957 = vadd.f32 %v938, %v956
        %958 = vdwg.mxu0
        %v959 = vsel %vm783, %v922, 0.0
        %v960 = vsel %vm784, %v923, 0.0
        %v961 = vsel %vm901, %v959, 0.0
        %962 = vadd.xlane.f32.xlu0 %v961
        %v963 = vpop.xlane.xlu0 %962
        %v964 = vsel %vm901, %v960, 0.0
        %965 = vadd.xlane.f32.xlu0 %v964
        %v966 = vpop.xlane.xlu0 %965
        %v967 = vperm.slane %v926, 1
        %v968 = vmul.f32 %v963, %v967
        %v969 = vmul.f32 %v966, %v967
        %v970 = vadd.f32 %v955, %v968
        %v971 = vadd.f32 %v957, %v969
        %v972 = vsel %vm797, %v922, 0.0
        %v973 = vsel %vm798, %v923, 0.0
        %v974 = vsel %vm901, %v972, 0.0
        %975 = vadd.xlane.f32.xlu0 %v974
        %v976 = vpop.xlane.xlu0 %975
        %v977 = vsel %vm901, %v973, 0.0
        %978 = vadd.xlane.f32.xlu0 %v977
        %v979 = vpop.xlane.xlu0 %978
        %v980 = vperm.slane %v926, 2
        %v981 = vmul.f32 %v976, %v980
        %v982 = vmul.f32 %v979, %v980
        %v983 = vadd.f32 %v970, %v981
        %v984 = vadd.f32 %v971, %v982
        %v985 = vsel %vm811, %v922, 0.0
        %v986 = vsel %vm812, %v923, 0.0
        %v987 = vsel %vm901, %v985, 0.0
        %988 = vadd.xlane.f32.xlu0 %v987
        %v989 = vpop.xlane.xlu0 %988
        %v990 = vsel %vm901, %v986, 0.0
        %991 = vadd.xlane.f32.xlu0 %v990
        %v992 = vpop.xlane.xlu0 %991
        %v993 = vperm.slane %v926, 3
        %v994 = vmul.f32 %v989, %v993
        %v995 = vmul.f32 %v992, %v993
        %v996 = vadd.f32 %v983, %v994
        %v997 = vadd.f32 %v984, %v995
        %v998 = vsel %vm825, %v922, 0.0
        %v999 = vsel %vm826, %v923, 0.0
        %v1000 = vsel %vm901, %v998, 0.0
        %1001 = vadd.xlane.f32.xlu0 %v1000
        %v1002 = vpop.xlane.xlu0 %1001
        %v1003 = vsel %vm901, %v999, 0.0
        %1004 = vadd.xlane.f32.xlu0 %v1003
        %v1005 = vpop.xlane.xlu0 %1004
        %v1006 = vperm.slane %v926, 4
        %v1007 = vmul.f32 %v1002, %v1006
        %v1008 = vmul.f32 %v1005, %v1006
        %v1009 = vadd.f32 %v996, %v1007
        %v1010 = vadd.f32 %v997, %v1008
        %v1011 = vsel %vm839, %v922, 0.0
        %v1012 = vsel %vm840, %v923, 0.0
        %v1013 = vsel %vm901, %v1011, 0.0
        %1014 = vadd.xlane.f32.xlu0 %v1013
        %v1015 = vpop.xlane.xlu0 %1014
        %v1016 = vsel %vm901, %v1012, 0.0
        %1017 = vadd.xlane.f32.xlu0 %v1016
        %v1018 = vpop.xlane.xlu0 %1017
        %v1019 = vperm.slane %v926, 5
        %v1020 = vmul.f32 %v1015, %v1019
        %v1021 = vmul.f32 %v1018, %v1019
        %v1022 = vadd.f32 %v1009, %v1020
        %v1023 = vadd.f32 %v1010, %v1021
        %v1024 = vsel %vm853, %v922, 0.0
        %v1025 = vsel %vm854, %v923, 0.0
        %v1026 = vsel %vm901, %v1024, 0.0
        %1027 = vadd.xlane.f32.xlu0 %v1026
        %v1028 = vpop.xlane.xlu0 %1027
        %v1029 = vsel %vm901, %v1025, 0.0
        %1030 = vadd.xlane.f32.xlu0 %v1029
        %v1031 = vpop.xlane.xlu0 %1030
        %v1032 = vperm.slane %v926, 6
        %v1033 = vmul.f32 %v1028, %v1032
        %v1034 = vmul.f32 %v1031, %v1032
        %v1035 = vadd.f32 %v1022, %v1033
        %v1036 = vadd.f32 %v1023, %v1034
        %v1037 = vsel %vm867, %v922, 0.0
        %v1038 = vsel %vm868, %v923, 0.0
        %v1039 = vsel %vm901, %v1037, 0.0
        %1040 = vadd.xlane.f32.xlu0 %v1039
        %v1041 = vpop.xlane.xlu0 %1040
        %v1042 = vsel %vm901, %v1038, 0.0
        %1043 = vadd.xlane.f32.xlu0 %v1042
        %v1044 = vpop.xlane.xlu0 %1043
        %v1045 = vperm.slane %v926, 7
        %v1046 = vmul.f32 %v1041, %v1045
        %v1047 = vmul.f32 %v1044, %v1045
        %v1048 = vadd.f32 %v1035, %v1046
        %v1049 = vadd.f32 %v1036, %v1047
        %v1050 = vsel %vm881, %v922, 0.0
        %v1051 = vsel %vm882, %v923, 0.0
        %v1052 = vsel %vm901, %v1050, 0.0
        %1053 = vadd.xlane.f32.xlu0 %v1052
        %v1054 = vpop.xlane.xlu0 %1053
        %v1055 = vsel %vm901, %v1051, 0.0
        %1056 = vadd.xlane.f32.xlu0 %v1055
        %v1057 = vpop.xlane.xlu0 %1056
        %v1058 = vperm.slane %v927, 0
        %v1059 = vmul.f32 %v1054, %v1058
        %v1060 = vmul.f32 %v1057, %v1058
        %v1061 = vadd.f32 %v1048, %v1059
        %v1062 = vadd.f32 %v1049, %v1060
        %v1063 = vpack.c.bf16 %v1062, %v1061
        %v1064 = vld [vmem:[%s609] sm:$0xf]
        %v1066 = vsel %vm723, %v1063, 0
        %v1069 = vsel %vm727, %v1064, 0
        %1071 = vmatpush.bf16.msra.mxu0 0
        %1072 = vmatpush.bf16.msra.mxu0 0
        %1073 = vmatpush.bf16.msra.mxu0 0
        %1074 = vmatpush.bf16.msra.mxu0 0
        %1075 = vmatpush.bf16.msra.mxu0 0
        %1076 = vmatpush.bf16.msra.mxu0 0
        %1077 = vmatpush.bf16.msra.mxu0 0
        %1078 = vmatpush.bf16.msra.mxu0 %v1069
        %1079 = vmatmul.bf16.gmra.mxu0 %v1066
        %v1080 = vpop.f32.mrf.mxu0
        %v1081 = vadd.f32 0.0, %v1080
        %v1082 = vpop.f32.mrf.mxu0
        %v1083 = vadd.f32 0.0, %v1082
        %1084 = vdwg.mxu0
        %p1085 = scmp.eq.s32.totalorder %s32, 0
        // Predicated region
        $region73: #{tpu_custom_call.1} parent=71 // pred_check
          %p1086 = pneg %p1085
        $region74: #{tpu_custom_call.1} parent=71 // pred_check_branch
          %1088 = sbr.rel (%p1086) target = $region76
        $region75: #{tpu_custom_call.1} parent=71 // pred_region
          %1089 = vst.msk [vmem:[#allocation2] sm:$0xff] %vm642, 0.0
          %1090 = vst.msk [vmem:[#allocation2 + $0x8] sm:$0xff] %vm642, 0.0
        $region76: #{tpu_custom_call.1} parent=71 // pred_fallthru
          _
        %v1091 = vld [vmem:[#allocation2] sm:$0xff]
        %v1092 = vld [vmem:[#allocation2 + $0x8] sm:$0xff]
        %v1093 = vadd.f32 %v1091, %v1081
        %v1094 = vadd.f32 %v1092, %v1083
        %1095 = vst.msk [vmem:[#allocation2] sm:$0xff] %vm642, %v1093
        %1096 = vst.msk [vmem:[#allocation2 + $0x8] sm:$0xff] %vm642, %v1094
        %p1097 = scmp.eq.s32.totalorder %s32, 3
        // Predicated region
        $region77: #{tpu_custom_call.1} parent=71 // pred_check
          %p1098 = pneg %p1097
        $region78: #{tpu_custom_call.1} parent=71 // pred_check_branch
          %1100 = sbr.rel (%p1098) target = $region80
        $region79: #{tpu_custom_call.1} parent=71 // pred_region
          %v1101 = vld [vmem:[#allocation2] sm:$0xff]
          %v1102 = vld [vmem:[#allocation2 + $0x8] sm:$0xff]
          %v1103 = vld [vmem:[%s10] sm:$0x1]
          %v1105 = vperm.slane %v1103, 0
          %v1107 = vadd.f32 %v1101, %v1105
          %v1108 = vadd.f32 %v1102, %v1105
          %1109 = vst.msk [vmem:[%s566] sm:$0xff] %vm642, %v1107
          %1110 = vst.msk [vmem:[%s566 + $0x8] sm:$0xff] %vm642, %v1108
        $region80: #{tpu_custom_call.1} parent=71 // pred_fallthru
          _
        %s1111 = sand.u32 %s370, 1
        %s1112 = scalar_lea.sflag [#allocation4], %s1111
        %s1113 = sand.u32 %s370, 1
        %s1114 = smul.addr %s1113, 16
        %s1115 = scalar_lea.vmem [#allocation3], %s1114
        // Predicated region
        $region81: #{tpu_custom_call.1} parent=71 // pred_check
          %p1116 = pneg %p380
        $region82: #{tpu_custom_call.1} parent=71 // pred_check_branch
          %1118 = sbr.rel (%p1116) target = $region84
        $region83: #{tpu_custom_call.1} parent=71 // pred_region
          %1120 = vsyncadd %s1112, 0
          %s1121 = smul.addr %s31, 2
          %s1122 = smul.addr %s1121, 8
          %s1123 = scalar_lea.hbm %s13, %s1122
          %s1124 = sshll.u32 %s1115, 4
          %s1125 = int_to_ptr.vmem [resolvable:$true] %s1124
          %s1126 = sshll.u32 %s1123, 4
          %s1127 = int_to_ptr.hbm [resolvable:$true] %s1126
          %1132 = dma.vmem_to_hbm [thread:$0]  %s1125, 256, %s1127, %s1112, 128, 128, 8
        $region84: #{tpu_custom_call.1} parent=71 // pred_fallthru
          _
      $region72: #{tpu_custom_call.1} parent=5 // pred_fallthru
        _
      %p1133 = scmp.le.s32.totalorder 2, %s22
      // Predicated region
      $region85: #{tpu_custom_call.1} parent=5 // pred_check
        %p1134 = pneg %p1133
      $region86: #{tpu_custom_call.1} parent=5 // pred_check_branch
        %1136 = sbr.rel (%p1134) target = $region88
      $region87: #{tpu_custom_call.1} parent=5 // pred_region
        %s1137 = ssub.s32 %s22, 2
        // Predicated region
        $region89: #{tpu_custom_call.1} parent=87 // pred_check
          %p1138 = pneg %p386
        $region90: #{tpu_custom_call.1} parent=87 // pred_check_branch
          %1140 = sbr.rel (%p1138) target = $region92
        $region91: #{tpu_custom_call.1} parent=87 // pred_region
          %s1141 = sand.u32 %s371, 1
          %s1142 = scalar_lea.sflag [#allocation4], %s1141
          %s1143 = sand.u32 %s371, 1
          %s1144 = smul.addr %s1143, 16
          %s1145 = scalar_lea.vmem [#allocation3], %s1144
          %1147 = dma.done %s1142, 256
        $region92: #{tpu_custom_call.1} parent=87 // pred_fallthru
          _
      $region88: #{tpu_custom_call.1} parent=5 // pred_fallthru
        _
    $region6: #{tpu_custom_call.1} parent=1 // loop_footer
      %s26 = sadd.s32 1, %s22
    $region7: #{tpu_custom_call.1} parent=1 // loop_footer_branch
      %21 = sbr.rel target = $region3
    $region8: #{tpu_custom_call.1} parent=1 // loop_exit
      _
    %1148 = vsyncpa [#allocation4], 1
    %s1149 = scalar_lea.sflag [#allocation4], 1
    %1150 = vsyncpa %s1149, 1

</llo_original>
